<compile_context>
chip_gen: v7x
topology: tpu7x:2x2x1
jax: 0.10.0
libtpu: 0.0.40
codegen_flags: <defaults>
</compile_context>

<pallas_src>
import functools

import numpy as np
import jax
import jax.numpy as jnp
from jax.experimental import pallas as pl
from jax.experimental.pallas import tpu as pltpu

LN_EPS = 1e-5    # nn.LayerNorm default eps
ADD_EPS = 1e-6   # the "+ 1e-06" in the torch forward
LANE = 128       # TPU lane width -> lane-dense (unmasked) stores


# ----------------------------- Pallas kernel -------------------------------
def fused_two_layer_kernel(ad_ref, ap_ref, xd_ref, xp_ref,
                           w1a_ref, w2a_ref, w3a_ref, w4a_ref, lwa_ref,
                           w1b_ref, w2b_ref, w3b_ref, w4b_ref, lwb_ref,
                           xd_out_ref,
                           msg_d_ref, msg_p_ref,
                           *, target_num, out_feats):
    """Both GNN layers, both node-type updates, in one kernel.

    ad_ref : (Nd, Nd+T)   [adj_dd | adj_dt]
    ap_ref : (Np, Np+Nd)  [adj_pp | zero-padded adj_dt.T]
    xd_ref : (Nd, FPAD)   drug features   (columns >= feat are zero)
    xp_ref : (Np, FPAD)   protein features
    w*a/lwa: (FPAD, FPAD) zero-padded layer-1 weights
    w*b/lwb: (FPAD, FPAD) zero-padded layer-2 weights
    msg_*  : VMEM scratch for the stacked message operands
    """
    nd = xd_ref.shape[0]
    npn = xp_ref.shape[0]
    fpad = xd_ref.shape[1]

    ad = ad_ref[...]
    ap = ap_ref[...]

    # ---- LayerNorm lane masks: hoisted, built once per kernel invocation ----
    col = jax.lax.broadcasted_iota(jnp.int32, (1, fpad), 1)
    masks = {f: (col < f).astype(jnp.float32) for f in set(out_feats)}

    def masked_ln(y, out_feat):
        # LayerNorm(out_feat, elementwise_affine=False) over the real columns.
        mask = masks[out_feat]
        inv_f = 1.0 / out_feat
        mean = jnp.sum(y * mask, axis=-1, keepdims=True) * inv_f
        d = (y - mean) * mask            # also re-zeroes the padded columns
        var = jnp.sum(d * d, axis=-1, keepdims=True) * inv_f
        return d * jax.lax.rsqrt(var + LN_EPS)

    def one_layer(xd, xp, w1, w2, w3, w4, lw, out_feat):
        xt = xp[:target_num, :]                       # x_protein[:T] (static)

        # drug update:    [adj_dd | adj_dt] @ [xd@w1 ; xt@w2] + xd@loop + eps
        msg_d_ref[:nd, :] = jnp.dot(xd, w1, preferred_element_type=jnp.float32)
        msg_d_ref[nd:, :] = jnp.dot(xt, w2, preferred_element_type=jnp.float32)
        y_d = (jnp.dot(ad, msg_d_ref[...], preferred_element_type=jnp.float32)
               + jnp.dot(xd, lw, preferred_element_type=jnp.float32) + ADD_EPS)

        # protein update: [adj_pp | adj_td] @ [xp@w4 ; xd@w3] + xp@loop + eps
        #   (adj_td zero-padded to Np rows == "add x2 only to first T rows")
        msg_p_ref[:npn, :] = jnp.dot(xp, w4, preferred_element_type=jnp.float32)
        msg_p_ref[npn:, :] = jnp.dot(xd, w3, preferred_element_type=jnp.float32)
        y_p = (jnp.dot(ap, msg_p_ref[...], preferred_element_type=jnp.float32)
               + jnp.dot(xp, lw, preferred_element_type=jnp.float32) + ADD_EPS)

        return masked_ln(y_d, out_feat), masked_ln(y_p, out_feat)

    xd = xd_ref[...]
    xp = xp_ref[...]
    xd, xp = one_layer(xd, xp, w1a_ref[...], w2a_ref[...], w3a_ref[...],
                       w4a_ref[...], lwa_ref[...], out_feats[0])
    xd, _ = one_layer(xd, xp, w1b_ref[...], w2b_ref[...], w3b_ref[...],
                      w4b_ref[...], lwb_ref[...], out_feats[1])

    xd_out_ref[...] = xd.astype(xd_out_ref.dtype)


def fused_two_layer_gnn(a_drug, a_prot, xd_pad, xp_pad, w_l1, w_l2,
                        *, target_num, out_feats):
    """Run both GNN layers in one pallas_call; returns final drug features."""
    nd, fpad = xd_pad.shape
    npn = xp_pad.shape[0]
    vmem = pl.BlockSpec(memory_space=pltpu.MemorySpace.VMEM)
    kernel = functools.partial(fused_two_layer_kernel,
                               target_num=target_num, out_feats=out_feats)
    return pl.pallas_call(
        kernel,
        out_shape=jax.ShapeDtypeStruct((nd, fpad), jnp.float32),
        in_specs=[vmem] * 14,
        out_specs=vmem,
        scratch_shapes=[pltpu.VMEM((nd + target_num, fpad), jnp.float32),
                        pltpu.VMEM((npn + nd, fpad), jnp.float32)],
    )(a_drug, a_prot, xd_pad, xp_pad, *w_l1, *w_l2)


# ------------------------------ parameters ---------------------------------
def _pad2(a, rows, cols):
    out = jnp.zeros((rows, cols), jnp.float32)
    return out.at[:a.shape[0], :a.shape[1]].set(a)


def xavier_uniform(key, shape, fan_in, fan_out, gain):
    bound = gain * np.sqrt(6.0 / (fan_in + fan_out))
    return jax.random.uniform(key, shape, jnp.float32, -bound, bound)


def block_diag(w):
    # w: (num_base, submat_in, submat_out) -> (num_base*si, num_base*so)
    nb, si, so = w.shape
    bd = jnp.zeros((nb * si, nb * so), jnp.float32)
    for b in range(nb):
        bd = bd.at[b * si:(b + 1) * si, b * so:(b + 1) * so].set(w[b])
    return bd


def init_rela_layer(key, in_feat, out_feat, num_base, fpad):
    """Weights are stored ALREADY zero-padded to (fpad, fpad) — hoisted out of
    the per-call path per the perf review."""
    si, so = in_feat // num_base, out_feat // num_base
    ks = jax.random.split(key, 5)
    gain = np.sqrt(2.0)  # calculate_gain('relu')
    flat = num_base * si * so
    w = {}
    for idx, name in enumerate(['w1', 'w2', 'w3', 'w4']):
        wflat = xavier_uniform(ks[idx], (num_base, si, so), flat, 1, gain)
        w[name] = _pad2(block_diag(wflat), fpad, fpad)
    w['loop'] = _pad2(
        xavier_uniform(ks[4], (in_feat, out_feat), out_feat, in_feat, gain),
        fpad, fpad)
    # TODO(synk): loop_weight_p exists in __init__ but is never initialized nor
    # used in forward; dropout is defined but never applied — both omitted.
    return w


def prepare_adjacency(adj_list):
    """Concatenated adjacencies, built ONCE and shared by both layers."""
    adj_dd, adj_dt, adj_pp = adj_list                 # (Nd,Nd), (Nd,T), (Np,Np)
    nd = adj_dd.shape[0]
    npn = adj_pp.shape[0]
    a_drug = jnp.concatenate([adj_dd, adj_dt], axis=1)           # (Nd, Nd+T)
    adj_td_pad = _pad2(adj_dt.T, npn, nd)                        # (Np, Nd)
    a_prot = jnp.concatenate([adj_pp, adj_td_pad], axis=1)       # (Np, Np+Nd)
    return a_drug, a_prot


# ----------------------------- model forward -------------------------------
def gnn_based_protein_forward(params, drug_node_id, kg_node_id, a_drug, a_prot,
                              *, target_num, h_dim, out_feats):
    # embedding gather (glue, plain JAX) from pre-padded tables; drug_mark is
    # None in this config -> no masking.
    xd_pad = jnp.take(params['drug_emb'], drug_node_id, axis=0)   # (Nd, FPAD)
    xp_pad = jnp.take(params['kg_emb'], kg_node_id, axis=0)       # (Np, FPAD)

    l1, l2 = params['layer1'], params['layer2']
    w_l1 = (l1['w1'], l1['w2'], l1['w3'], l1['w4'], l1['loop'])
    w_l2 = (l2['w1'], l2['w2'], l2['w3'], l2['w4'], l2['loop'])

    xd_final = fused_two_layer_gnn(a_drug, a_prot, xd_pad, xp_pad, w_l1, w_l2,
                                   target_num=target_num, out_feats=out_feats)

    # final slices use the layer config (layer2 out_feat), not the input width
    return xd_pad[:, :h_dim], xd_final[:, :out_feats[1]]


# ------------------------- pure-JAX reference ------------------------------
def _ln(y):
    m = jnp.mean(y, axis=-1, keepdims=True)
    v = jnp.mean((y - m) ** 2, axis=-1, keepdims=True)
    return (y - m) / jnp.sqrt(v + LN_EPS)


def ref_layer(p, in_feat, out_feat, x_drug, x_protein, adj_list, target_num):
    adj_dd, adj_dt, adj_pp = adj_list
    w1 = p['w1'][:in_feat, :out_feat]
    w2 = p['w2'][:in_feat, :out_feat]
    w3 = p['w3'][:in_feat, :out_feat]
    w4 = p['w4'][:in_feat, :out_feat]
    lw = p['loop'][:in_feat, :out_feat]
    xt = x_protein[:target_num]
    xd_new = _ln(adj_dd @ (x_drug @ w1) + adj_dt @ (xt @ w2)
                 + x_drug @ lw + ADD_EPS)
    x1 = adj_pp @ (x_protein @ w4)
    x2 = adj_dt.T @ (x_drug @ w3)
    x3 = x_protein @ lw
    xn = x1 + x3
    xn = xn.at[:target_num].add(x2)
    xp_new = _ln(xn + ADD_EPS)
    return xd_new, xp_new


def ref_forward(params, drug_node_id, kg_node_id, adj_list, target_num,
                h_dim, out_dim):
    x_drug_init = jnp.take(params['drug_emb'], drug_node_id, axis=0)[:, :h_dim]
    x_kg = jnp.take(params['kg_emb'], kg_node_id, axis=0)[:, :h_dim]
    x_drug, x_kg = ref_layer(params['layer1'], h_dim, out_dim,
                             x_drug_init, x_kg, adj_list, target_num)
    x_drug, x_kg = ref_layer(params['layer2'], out_dim, out_dim,
                             x_drug, x_kg, adj_list, target_num)
    return x_drug_init, x_drug


# --------------------------------- main -------------------------------------
if __name__ == "__main__":
    drug_node_num, protein_node_num = 16, 32
    h_dim, out_dim, num_base = 32, 32, 4
    target_num = 16

    # padded feature width covers both layers' in/out features
    fpad = pl.cdiv(max(h_dim, out_dim), LANE) * LANE

    key = jax.random.PRNGKey(0)
    k_de, k_pe, k_l1, k_l2, k_a0, k_a1, k_a2 = jax.random.split(key, 7)

    # params are stored pre-padded (lane-dense) -> nothing to pad per call
    params = {
        'drug_emb': _pad2(jax.random.normal(k_de, (drug_node_num, h_dim),
                                            jnp.float32), drug_node_num, fpad),
        'kg_emb': _pad2(jax.random.normal(k_pe, (protein_node_num, h_dim),
                                          jnp.float32), protein_node_num, fpad),
        'layer1': init_rela_layer(k_l1, h_dim, out_dim, num_base, fpad),
        'layer2': init_rela_layer(k_l2, out_dim, out_dim, num_base, fpad),
    }

    drug_node_id = jnp.arange(drug_node_num, dtype=jnp.int32)
    kg_node_id = jnp.arange(protein_node_num, dtype=jnp.int32)

    Nd, Np, T = drug_node_num, protein_node_num, target_num
    adj_dd = jax.random.uniform(k_a0, (Nd, Nd), jnp.float32) / Nd
    adj_dt = jax.random.uniform(k_a1, (Nd, T), jnp.float32) / T
    adj_pp = jax.random.uniform(k_a2, (Np, Np), jnp.float32) / Np
    adj_list = (adj_dd, adj_dt, adj_pp)

    # adjacency prep hoisted out of the per-call path (done once)
    a_drug, a_prot = prepare_adjacency(adj_list)
    a_drug, a_prot = jax.block_until_ready((a_drug, a_prot))

    # whole forward = embedding gather + ONE fused pallas_call, under one jit
    fwd = jax.jit(functools.partial(
        gnn_based_protein_forward,
        target_num=target_num, h_dim=h_dim, out_feats=(out_dim, out_dim)))
    x_drug_init, x_drug = fwd(params, drug_node_id, kg_node_id, a_drug, a_prot)
    jax.block_until_ready((x_drug_init, x_drug))

    # correctness check vs. pure-JAX reference
    ref_init, ref_drug = ref_forward(params, drug_node_id, kg_node_id, adj_list,
                                     target_num, h_dim, out_dim)
    np.testing.assert_allclose(np.asarray(x_drug_init), np.asarray(ref_init),
                               rtol=1e-4, atol=1e-3)
    np.testing.assert_allclose(np.asarray(x_drug), np.asarray(ref_drug),
                               rtol=1e-4, atol=1e-3)

    print("KERNEL_OK")
</pallas_src>

<mosaic_0001>
module attributes {stable_mosaic.version = 11 : i64} {
  func.func @fused_two_layer_kernel(%arg0: memref<16x32xf32, #tpu.memory_space<vmem>>, %arg1: memref<32x48xf32, #tpu.memory_space<vmem>>, %arg2: memref<16x128xf32, #tpu.memory_space<vmem>>, %arg3: memref<32x128xf32, #tpu.memory_space<vmem>>, %arg4: memref<128x128xf32, #tpu.memory_space<vmem>>, %arg5: memref<128x128xf32, #tpu.memory_space<vmem>>, %arg6: memref<128x128xf32, #tpu.memory_space<vmem>>, %arg7: memref<128x128xf32, #tpu.memory_space<vmem>>, %arg8: memref<128x128xf32, #tpu.memory_space<vmem>>, %arg9: memref<128x128xf32, #tpu.memory_space<vmem>>, %arg10: memref<128x128xf32, #tpu.memory_space<vmem>>, %arg11: memref<128x128xf32, #tpu.memory_space<vmem>>, %arg12: memref<128x128xf32, #tpu.memory_space<vmem>>, %arg13: memref<128x128xf32, #tpu.memory_space<vmem>>, %arg14: memref<16x128xf32, #tpu.memory_space<vmem>>, %arg15: memref<32x128xf32, #tpu.memory_space<vmem>>, %arg16: memref<48x128xf32, #tpu.memory_space<vmem>>) attributes {dimension_semantics = [], scalar_prefetch = 0 : i64, scratch_operands = 2 : i64, tpu.core_type = #tpu.core_type<tc>} {
    %c0 = arith.constant 0 : index
    %c0_0 = arith.constant 0 : index
    %0 = vector.load %arg0[%c0, %c0_0] : memref<16x32xf32, #tpu.memory_space<vmem>>, vector<16x32xf32>
    %c0_1 = arith.constant 0 : index
    %c0_2 = arith.constant 0 : index
    %1 = vector.load %arg1[%c0_1, %c0_2] : memref<32x48xf32, #tpu.memory_space<vmem>>, vector<32x48xf32>
    %2 = tpu.iota {dimensions = array<i32: 1>} : vector<1x128xi32>
    %c32_i32 = arith.constant 32 : i32
    %3 = vector.broadcast %c32_i32 : i32 to vector<1x128xi32>
    %4 = arith.cmpi slt, %2, %3 : vector<1x128xi32>
    %5 = arith.extui %4 : vector<1x128xi1> to vector<1x128xi32>
    %6 = arith.sitofp %5 : vector<1x128xi32> to vector<1x128xf32>
    %c0_3 = arith.constant 0 : index
    %c0_4 = arith.constant 0 : index
    %7 = vector.load %arg2[%c0_3, %c0_4] : memref<16x128xf32, #tpu.memory_space<vmem>>, vector<16x128xf32>
    %c0_5 = arith.constant 0 : index
    %c0_6 = arith.constant 0 : index
    %8 = vector.load %arg3[%c0_5, %c0_6] : memref<32x128xf32, #tpu.memory_space<vmem>>, vector<32x128xf32>
    %c0_7 = arith.constant 0 : index
    %c0_8 = arith.constant 0 : index
    %9 = vector.load %arg4[%c0_7, %c0_8] : memref<128x128xf32, #tpu.memory_space<vmem>>, vector<128x128xf32>
    %c0_9 = arith.constant 0 : index
    %c0_10 = arith.constant 0 : index
    %10 = vector.load %arg5[%c0_9, %c0_10] : memref<128x128xf32, #tpu.memory_space<vmem>>, vector<128x128xf32>
    %c0_11 = arith.constant 0 : index
    %c0_12 = arith.constant 0 : index
    %11 = vector.load %arg6[%c0_11, %c0_12] : memref<128x128xf32, #tpu.memory_space<vmem>>, vector<128x128xf32>
    %c0_13 = arith.constant 0 : index
    %c0_14 = arith.constant 0 : index
    %12 = vector.load %arg7[%c0_13, %c0_14] : memref<128x128xf32, #tpu.memory_space<vmem>>, vector<128x128xf32>
    %c0_15 = arith.constant 0 : index
    %c0_16 = arith.constant 0 : index
    %13 = vector.load %arg8[%c0_15, %c0_16] : memref<128x128xf32, #tpu.memory_space<vmem>>, vector<128x128xf32>
    %14 = vector.extract_strided_slice %8 {offsets = [0, 0], sizes = [16, 128], strides = [1, 1]} : vector<32x128xf32> to vector<16x128xf32>
    %cst = arith.constant dense<0.000000e+00> : vector<16x128xf32>
    %15 = tpu.matmul %7, %9, %cst {dimension_numbers = #tpu.dot_dimension_numbers<[1], [0], [0], [1], [0, 0, 1, 1], [], []>} : vector<16x128xf32>, vector<128x128xf32>, vector<16x128xf32> -> vector<16x128xf32>
    %c0_17 = arith.constant 0 : index
    %c0_18 = arith.constant 0 : index
    %16 = vector.load %arg15[%c0_17, %c0_18] : memref<32x128xf32, #tpu.memory_space<vmem>>, vector<16x128xf32>
    tpu.vector_store %arg15[%c0_17, %c0_18], %15 {strides = array<i32>} : memref<32x128xf32, #tpu.memory_space<vmem>>, vector<16x128xf32>,
    %cst_19 = arith.constant dense<0.000000e+00> : vector<16x128xf32>
    %17 = tpu.matmul %14, %10, %cst_19 {dimension_numbers = #tpu.dot_dimension_numbers<[1], [0], [0], [1], [0, 0, 1, 1], [], []>} : vector<16x128xf32>, vector<128x128xf32>, vector<16x128xf32> -> vector<16x128xf32>
    %c16 = arith.constant 16 : index
    %c0_20 = arith.constant 0 : index
    %18 = vector.load %arg15[%c16, %c0_20] : memref<32x128xf32, #tpu.memory_space<vmem>>, vector<16x128xf32>
    tpu.vector_store %arg15[%c16, %c0_20], %17 {strides = array<i32>} : memref<32x128xf32, #tpu.memory_space<vmem>>, vector<16x128xf32>,
    %c0_21 = arith.constant 0 : index
    %c0_22 = arith.constant 0 : index
    %19 = vector.load %arg15[%c0_21, %c0_22] : memref<32x128xf32, #tpu.memory_space<vmem>>, vector<32x128xf32>
    %cst_23 = arith.constant dense<0.000000e+00> : vector<16x128xf32>
    %20 = tpu.matmul %0, %19, %cst_23 {dimension_numbers = #tpu.dot_dimension_numbers<[1], [0], [0], [1], [0, 0, 1, 1], [], []>} : vector<16x32xf32>, vector<32x128xf32>, vector<16x128xf32> -> vector<16x128xf32>
    %cst_24 = arith.constant dense<0.000000e+00> : vector<16x128xf32>
    %21 = tpu.matmul %7, %13, %cst_24 {dimension_numbers = #tpu.dot_dimension_numbers<[1], [0], [0], [1], [0, 0, 1, 1], [], []>} : vector<16x128xf32>, vector<128x128xf32>, vector<16x128xf32> -> vector<16x128xf32>
    %22 = arith.addf %20, %21 : vector<16x128xf32>
    %cst_25 = arith.constant 9.99999997E-7 : f32
    %23 = vector.broadcast %cst_25 : f32 to vector<16x128xf32>
    %24 = arith.addf %22, %23 : vector<16x128xf32>
    %cst_26 = arith.constant dense<0.000000e+00> : vector<32x128xf32>
    %25 = tpu.matmul %8, %12, %cst_26 {dimension_numbers = #tpu.dot_dimension_numbers<[1], [0], [0], [1], [0, 0, 1, 1], [], []>} : vector<32x128xf32>, vector<128x128xf32>, vector<32x128xf32> -> vector<32x128xf32>
    %c0_27 = arith.constant 0 : index
    %c0_28 = arith.constant 0 : index
    %26 = vector.load %arg16[%c0_27, %c0_28] : memref<48x128xf32, #tpu.memory_space<vmem>>, vector<32x128xf32>
    tpu.vector_store %arg16[%c0_27, %c0_28], %25 {strides = array<i32>} : memref<48x128xf32, #tpu.memory_space<vmem>>, vector<32x128xf32>,
    %cst_29 = arith.constant dense<0.000000e+00> : vector<16x128xf32>
    %27 = tpu.matmul %7, %11, %cst_29 {dimension_numbers = #tpu.dot_dimension_numbers<[1], [0], [0], [1], [0, 0, 1, 1], [], []>} : vector<16x128xf32>, vector<128x128xf32>, vector<16x128xf32> -> vector<16x128xf32>
    %c32 = arith.constant 32 : index
    %c0_30 = arith.constant 0 : index
    %28 = vector.load %arg16[%c32, %c0_30] : memref<48x128xf32, #tpu.memory_space<vmem>>, vector<16x128xf32>
    tpu.vector_store %arg16[%c32, %c0_30], %27 {strides = array<i32>} : memref<48x128xf32, #tpu.memory_space<vmem>>, vector<16x128xf32>,
    %c0_31 = arith.constant 0 : index
    %c0_32 = arith.constant 0 : index
    %29 = vector.load %arg16[%c0_31, %c0_32] : memref<48x128xf32, #tpu.memory_space<vmem>>, vector<48x128xf32>
    %cst_33 = arith.constant dense<0.000000e+00> : vector<32x128xf32>
    %30 = tpu.matmul %1, %29, %cst_33 {dimension_numbers = #tpu.dot_dimension_numbers<[1], [0], [0], [1], [0, 0, 1, 1], [], []>} : vector<32x48xf32>, vector<48x128xf32>, vector<32x128xf32> -> vector<32x128xf32>
    %cst_34 = arith.constant dense<0.000000e+00> : vector<32x128xf32>
    %31 = tpu.matmul %8, %13, %cst_34 {dimension_numbers = #tpu.dot_dimension_numbers<[1], [0], [0], [1], [0, 0, 1, 1], [], []>} : vector<32x128xf32>, vector<128x128xf32>, vector<32x128xf32> -> vector<32x128xf32>
    %32 = arith.addf %30, %31 : vector<32x128xf32>
    %cst_35 = arith.constant 9.99999997E-7 : f32
    %33 = vector.broadcast %cst_35 : f32 to vector<32x128xf32>
    %34 = arith.addf %32, %33 : vector<32x128xf32>
    %35 = vector.broadcast %6 : vector<1x128xf32> to vector<16x128xf32>
    %36 = arith.mulf %24, %35 : vector<16x128xf32>
    %cst_36 = arith.constant dense<0.000000e+00> : vector<16xf32>
    %37 = vector.multi_reduction <add>, %36, %cst_36 [1] : vector<16x128xf32> to vector<16xf32>
    %38 = vector.shape_cast %37 : vector<16xf32> to vector<16x1xf32>
    %cst_37 = arith.constant 3.125000e-02 : f32
    %39 = vector.broadcast %cst_37 : f32 to vector<16x1xf32>
    %40 = arith.mulf %38, %39 : vector<16x1xf32>
    %41 = vector.broadcast %40 : vector<16x1xf32> to vector<16x128xf32>
    %42 = arith.subf %24, %41 : vector<16x128xf32>
    %43 = vector.broadcast %6 : vector<1x128xf32> to vector<16x128xf32>
    %44 = arith.mulf %42, %43 : vector<16x128xf32>
    %45 = arith.mulf %44, %44 : vector<16x128xf32>
    %cst_38 = arith.constant dense<0.000000e+00> : vector<16xf32>
    %46 = vector.multi_reduction <add>, %45, %cst_38 [1] : vector<16x128xf32> to vector<16xf32>
    %47 = vector.shape_cast %46 : vector<16xf32> to vector<16x1xf32>
    %cst_39 = arith.constant 3.125000e-02 : f32
    %48 = vector.broadcast %cst_39 : f32 to vector<16x1xf32>
    %49 = arith.mulf %47, %48 : vector<16x1xf32>
    %cst_40 = arith.constant 9.99999974E-6 : f32
    %50 = vector.broadcast %cst_40 : f32 to vector<16x1xf32>
    %51 = arith.addf %49, %50 : vector<16x1xf32>
    %52 = math.rsqrt %51 : vector<16x1xf32>
    %53 = vector.broadcast %52 : vector<16x1xf32> to vector<16x128xf32>
    %54 = arith.mulf %44, %53 : vector<16x128xf32>
    %55 = vector.broadcast %6 : vector<1x128xf32> to vector<32x128xf32>
    %56 = arith.mulf %34, %55 : vector<32x128xf32>
    %cst_41 = arith.constant dense<0.000000e+00> : vector<32xf32>
    %57 = vector.multi_reduction <add>, %56, %cst_41 [1] : vector<32x128xf32> to vector<32xf32>
    %58 = vector.shape_cast %57 : vector<32xf32> to vector<32x1xf32>
    %cst_42 = arith.constant 3.125000e-02 : f32
    %59 = vector.broadcast %cst_42 : f32 to vector<32x1xf32>
    %60 = arith.mulf %58, %59 : vector<32x1xf32>
    %61 = vector.broadcast %60 : vector<32x1xf32> to vector<32x128xf32>
    %62 = arith.subf %34, %61 : vector<32x128xf32>
    %63 = vector.broadcast %6 : vector<1x128xf32> to vector<32x128xf32>
    %64 = arith.mulf %62, %63 : vector<32x128xf32>
    %65 = arith.mulf %64, %64 : vector<32x128xf32>
    %cst_43 = arith.constant dense<0.000000e+00> : vector<32xf32>
    %66 = vector.multi_reduction <add>, %65, %cst_43 [1] : vector<32x128xf32> to vector<32xf32>
    %67 = vector.shape_cast %66 : vector<32xf32> to vector<32x1xf32>
    %cst_44 = arith.constant 3.125000e-02 : f32
    %68 = vector.broadcast %cst_44 : f32 to vector<32x1xf32>
    %69 = arith.mulf %67, %68 : vector<32x1xf32>
    %cst_45 = arith.constant 9.99999974E-6 : f32
    %70 = vector.broadcast %cst_45 : f32 to vector<32x1xf32>
    %71 = arith.addf %69, %70 : vector<32x1xf32>
    %72 = math.rsqrt %71 : vector<32x1xf32>
    %73 = vector.broadcast %72 : vector<32x1xf32> to vector<32x128xf32>
    %74 = arith.mulf %64, %73 : vector<32x128xf32>
    %c0_46 = arith.constant 0 : index
    %c0_47 = arith.constant 0 : index
    %75 = vector.load %arg9[%c0_46, %c0_47] : memref<128x128xf32, #tpu.memory_space<vmem>>, vector<128x128xf32>
    %c0_48 = arith.constant 0 : index
    %c0_49 = arith.constant 0 : index
    %76 = vector.load %arg10[%c0_48, %c0_49] : memref<128x128xf32, #tpu.memory_space<vmem>>, vector<128x128xf32>
    %c0_50 = arith.constant 0 : index
    %c0_51 = arith.constant 0 : index
    %77 = vector.load %arg11[%c0_50, %c0_51] : memref<128x128xf32, #tpu.memory_space<vmem>>, vector<128x128xf32>
    %c0_52 = arith.constant 0 : index
    %c0_53 = arith.constant 0 : index
    %78 = vector.load %arg12[%c0_52, %c0_53] : memref<128x128xf32, #tpu.memory_space<vmem>>, vector<128x128xf32>
    %c0_54 = arith.constant 0 : index
    %c0_55 = arith.constant 0 : index
    %79 = vector.load %arg13[%c0_54, %c0_55] : memref<128x128xf32, #tpu.memory_space<vmem>>, vector<128x128xf32>
    %80 = vector.extract_strided_slice %74 {offsets = [0, 0], sizes = [16, 128], strides = [1, 1]} : vector<32x128xf32> to vector<16x128xf32>
    %cst_56 = arith.constant dense<0.000000e+00> : vector<16x128xf32>
    %81 = tpu.matmul %54, %75, %cst_56 {dimension_numbers = #tpu.dot_dimension_numbers<[1], [0], [0], [1], [0, 0, 1, 1], [], []>} : vector<16x128xf32>, vector<128x128xf32>, vector<16x128xf32> -> vector<16x128xf32>
    %c0_57 = arith.constant 0 : index
    %c0_58 = arith.constant 0 : index
    %82 = vector.load %arg15[%c0_57, %c0_58] : memref<32x128xf32, #tpu.memory_space<vmem>>, vector<16x128xf32>
    tpu.vector_store %arg15[%c0_57, %c0_58], %81 {strides = array<i32>} : memref<32x128xf32, #tpu.memory_space<vmem>>, vector<16x128xf32>,
    %cst_59 = arith.constant dense<0.000000e+00> : vector<16x128xf32>
    %83 = tpu.matmul %80, %76, %cst_59 {dimension_numbers = #tpu.dot_dimension_numbers<[1], [0], [0], [1], [0, 0, 1, 1], [], []>} : vector<16x128xf32>, vector<128x128xf32>, vector<16x128xf32> -> vector<16x128xf32>
    %c16_60 = arith.constant 16 : index
    %c0_61 = arith.constant 0 : index
    %84 = vector.load %arg15[%c16_60, %c0_61] : memref<32x128xf32, #tpu.memory_space<vmem>>, vector<16x128xf32>
    tpu.vector_store %arg15[%c16_60, %c0_61], %83 {strides = array<i32>} : memref<32x128xf32, #tpu.memory_space<vmem>>, vector<16x128xf32>,
    %c0_62 = arith.constant 0 : index
    %c0_63 = arith.constant 0 : index
    %85 = vector.load %arg15[%c0_62, %c0_63] : memref<32x128xf32, #tpu.memory_space<vmem>>, vector<32x128xf32>
    %cst_64 = arith.constant dense<0.000000e+00> : vector<16x128xf32>
    %86 = tpu.matmul %0, %85, %cst_64 {dimension_numbers = #tpu.dot_dimension_numbers<[1], [0], [0], [1], [0, 0, 1, 1], [], []>} : vector<16x32xf32>, vector<32x128xf32>, vector<16x128xf32> -> vector<16x128xf32>
    %cst_65 = arith.constant dense<0.000000e+00> : vector<16x128xf32>
    %87 = tpu.matmul %54, %79, %cst_65 {dimension_numbers = #tpu.dot_dimension_numbers<[1], [0], [0], [1], [0, 0, 1, 1], [], []>} : vector<16x128xf32>, vector<128x128xf32>, vector<16x128xf32> -> vector<16x128xf32>
    %88 = arith.addf %86, %87 : vector<16x128xf32>
    %cst_66 = arith.constant 9.99999997E-7 : f32
    %89 = vector.broadcast %cst_66 : f32 to vector<16x128xf32>
    %90 = arith.addf %88, %89 : vector<16x128xf32>
    %cst_67 = arith.constant dense<0.000000e+00> : vector<32x128xf32>
    %91 = tpu.matmul %74, %78, %cst_67 {dimension_numbers = #tpu.dot_dimension_numbers<[1], [0], [0], [1], [0, 0, 1, 1], [], []>} : vector<32x128xf32>, vector<128x128xf32>, vector<32x128xf32> -> vector<32x128xf32>
    %c0_68 = arith.constant 0 : index
    %c0_69 = arith.constant 0 : index
    %92 = vector.load %arg16[%c0_68, %c0_69] : memref<48x128xf32, #tpu.memory_space<vmem>>, vector<32x128xf32>
    tpu.vector_store %arg16[%c0_68, %c0_69], %91 {strides = array<i32>} : memref<48x128xf32, #tpu.memory_space<vmem>>, vector<32x128xf32>,
    %cst_70 = arith.constant dense<0.000000e+00> : vector<16x128xf32>
    %93 = tpu.matmul %54, %77, %cst_70 {dimension_numbers = #tpu.dot_dimension_numbers<[1], [0], [0], [1], [0, 0, 1, 1], [], []>} : vector<16x128xf32>, vector<128x128xf32>, vector<16x128xf32> -> vector<16x128xf32>
    %c32_71 = arith.constant 32 : index
    %c0_72 = arith.constant 0 : index
    %94 = vector.load %arg16[%c32_71, %c0_72] : memref<48x128xf32, #tpu.memory_space<vmem>>, vector<16x128xf32>
    tpu.vector_store %arg16[%c32_71, %c0_72], %93 {strides = array<i32>} : memref<48x128xf32, #tpu.memory_space<vmem>>, vector<16x128xf32>,
    %95 = vector.broadcast %6 : vector<1x128xf32> to vector<16x128xf32>
    %96 = arith.mulf %90, %95 : vector<16x128xf32>
    %cst_73 = arith.constant dense<0.000000e+00> : vector<16xf32>
    %97 = vector.multi_reduction <add>, %96, %cst_73 [1] : vector<16x128xf32> to vector<16xf32>
    %98 = vector.shape_cast %97 : vector<16xf32> to vector<16x1xf32>
    %cst_74 = arith.constant 3.125000e-02 : f32
    %99 = vector.broadcast %cst_74 : f32 to vector<16x1xf32>
    %100 = arith.mulf %98, %99 : vector<16x1xf32>
    %101 = vector.broadcast %100 : vector<16x1xf32> to vector<16x128xf32>
    %102 = arith.subf %90, %101 : vector<16x128xf32>
    %103 = vector.broadcast %6 : vector<1x128xf32> to vector<16x128xf32>
    %104 = arith.mulf %102, %103 : vector<16x128xf32>
    %105 = arith.mulf %104, %104 : vector<16x128xf32>
    %cst_75 = arith.constant dense<0.000000e+00> : vector<16xf32>
    %106 = vector.multi_reduction <add>, %105, %cst_75 [1] : vector<16x128xf32> to vector<16xf32>
    %107 = vector.shape_cast %106 : vector<16xf32> to vector<16x1xf32>
    %cst_76 = arith.constant 3.125000e-02 : f32
    %108 = vector.broadcast %cst_76 : f32 to vector<16x1xf32>
    %109 = arith.mulf %107, %108 : vector<16x1xf32>
    %cst_77 = arith.constant 9.99999974E-6 : f32
    %110 = vector.broadcast %cst_77 : f32 to vector<16x1xf32>
    %111 = arith.addf %109, %110 : vector<16x1xf32>
    %112 = math.rsqrt %111 : vector<16x1xf32>
    %113 = vector.broadcast %112 : vector<16x1xf32> to vector<16x128xf32>
    %114 = arith.mulf %104, %113 : vector<16x128xf32>
    %c0_78 = arith.constant 0 : index
    %c0_79 = arith.constant 0 : index
    %115 = vector.load %arg14[%c0_78, %c0_79] : memref<16x128xf32, #tpu.memory_space<vmem>>, vector<16x128xf32>
    tpu.vector_store %arg14[%c0_78, %c0_79], %114 {strides = array<i32>} : memref<16x128xf32, #tpu.memory_space<vmem>>, vector<16x128xf32>,
    return
  }
}

</mosaic_0001>

<llo_original>
// kernel: gnn_based_protein_forward.1
$region0: #{gnn_based_protein_forward.1}
  #allocation0 [shape = 'u32[]', space=smem, size = 0x4, offset = 0x4, fixed_abs, tag = 'smem constant byte address 0x4 - core index']
  #allocation1 [shape = 'u32[144,128]{1,0:T(1,128)}', space=vmem, size = 0x12000, scoped, tag = 'internal scratch']
  #allocation2 [shape = 'f32[32,128]{1,0:T(8,128)}', space=vmem, size = 0x4000, scoped, tag = 'scratch operand']
  #allocation3 [shape = 'f32[48,128]{1,0:T(8,128)}', space=vmem, size = 0x6000, scoped, tag = 'scratch operand']
  %s0 = inlined_call_operand.vmem [shape: f32[16,32], index: 0, kind: input, shape index: {}]
  %s1 = inlined_call_operand.vmem [shape: f32[32,48], index: 1, kind: input, shape index: {}]
  %s2 = inlined_call_operand.vmem [shape: f32[16,128], index: 2, kind: input, shape index: {}]
  %s3 = inlined_call_operand.vmem [shape: f32[32,128], index: 3, kind: input, shape index: {}]
  %s4 = inlined_call_operand.vmem [shape: f32[128,128], index: 4, kind: input, shape index: {}]
  %s5 = inlined_call_operand.vmem [shape: f32[128,128], index: 5, kind: input, shape index: {}]
  %s6 = inlined_call_operand.vmem [shape: f32[128,128], index: 6, kind: input, shape index: {}]
  %s7 = inlined_call_operand.vmem [shape: f32[128,128], index: 7, kind: input, shape index: {}]
  %s8 = inlined_call_operand.hbm [shape: f32[128,128], index: 8, kind: input, shape index: {}]
  %s9 = inlined_call_operand.hbm [shape: f32[128,128], index: 9, kind: input, shape index: {}]
  %s10 = inlined_call_operand.hbm [shape: f32[128,128], index: 10, kind: input, shape index: {}]
  %s11 = inlined_call_operand.hbm [shape: f32[128,128], index: 11, kind: input, shape index: {}]
  %s12 = inlined_call_operand.hbm [shape: f32[128,128], index: 12, kind: input, shape index: {}]
  %s13 = inlined_call_operand.hbm [shape: f32[128,128], index: 13, kind: input, shape index: {}]
  %s14 = inlined_call_operand.hbm [shape: f32[16,128], index: 14, kind: output, shape index: {}]
  %s15 = sld [smem:[#allocation0]]
  $region90: #{gnn_based_protein_forward.1} parent=0
    _
  %s17 = ssub.s32 1, %s15
  %s18 = scalar_select 0, %s17, %s15
  $region1: #{gnn_based_protein_forward.1} parent=0
    #allocation4 [shape = 'u8[65536]{0}', space=vmem, size = 0x10000, scoped, tag = 'input window, operand 8, single buffered']
    #allocation5 [shape = 's32[1]{0}', space=sflag, size = 0x4, scoped, tag = 'scoped memory for gnn_based_protein_forward.1']
    #allocation6 [shape = 's32[1]{0}', space=sflag, size = 0x4, scoped, tag = 'scoped memory for gnn_based_protein_forward.1']
    #allocation7 [shape = 'u8[65536]{0}', space=vmem, size = 0x10000, scoped, tag = 'input window, operand 9, single buffered']
    #allocation8 [shape = 's32[1]{0}', space=sflag, size = 0x4, scoped, tag = 'scoped memory for gnn_based_protein_forward.1']
    #allocation9 [shape = 'u8[65536]{0}', space=vmem, size = 0x10000, scoped, tag = 'input window, operand 10, single buffered']
    #allocation10 [shape = 'u8[65536]{0}', space=vmem, size = 0x10000, scoped, tag = 'input window, operand 11, single buffered']
    #allocation11 [shape = 's32[1]{0}', space=sflag, size = 0x4, scoped, tag = 'scoped memory for gnn_based_protein_forward.1']
    #allocation12 [shape = 'u8[65536]{0}', space=vmem, size = 0x10000, scoped, tag = 'input window, operand 12, single buffered']
    #allocation13 [shape = 'u8[65536]{0}', space=vmem, size = 0x10000, scoped, tag = 'input window, operand 13, single buffered']
    #allocation14 [shape = 's32[1]{0}', space=sflag, size = 0x4, scoped, tag = 'scoped memory for gnn_based_protein_forward.1']
    #allocation15 [shape = 'u8[8192]{0}', space=vmem, size = 0x2000, scoped, tag = 'output window, operand 0, single buffered']
    %19 = vsyncpa [#allocation5], 0
    %20 = vsyncpa [#allocation8], 0
    %21 = vsyncpa [#allocation11], 0
    %22 = vsyncpa [#allocation14], 0
    %23 = vsyncpa [#allocation6], 0
    // Predicated region
    $region2: #{gnn_based_protein_forward.1} parent=1 // pred_check
      _
    $region3: #{gnn_based_protein_forward.1} parent=1 // pred_check_branch
      %25 = sbr.rel (0) target = $region5
    $region4: #{gnn_based_protein_forward.1} parent=1 // pred_region
      _
    $region5: #{gnn_based_protein_forward.1} parent=1 // pred_fallthru
      _
    // Predicated region
    $region6: #{gnn_based_protein_forward.1} parent=1 // pred_check
      _
    $region7: #{gnn_based_protein_forward.1} parent=1 // pred_check_branch
      %27 = sbr.rel (0) target = $region9
    $region8: #{gnn_based_protein_forward.1} parent=1 // pred_region
      _
    $region9: #{gnn_based_protein_forward.1} parent=1 // pred_fallthru
      _
    // Predicated region
    $region10: #{gnn_based_protein_forward.1} parent=1 // pred_check
      _
    $region11: #{gnn_based_protein_forward.1} parent=1 // pred_check_branch
      %29 = sbr.rel (0) target = $region13
    $region12: #{gnn_based_protein_forward.1} parent=1 // pred_region
      _
    $region13: #{gnn_based_protein_forward.1} parent=1 // pred_fallthru
      _
    // Predicated region
    $region14: #{gnn_based_protein_forward.1} parent=1 // pred_check
      _
    $region15: #{gnn_based_protein_forward.1} parent=1 // pred_check_branch
      %31 = sbr.rel (0) target = $region17
    $region16: #{gnn_based_protein_forward.1} parent=1 // pred_region
      _
    $region17: #{gnn_based_protein_forward.1} parent=1 // pred_fallthru
      _
    // Predicated region
    $region18: #{gnn_based_protein_forward.1} parent=1 // pred_check
      _
    $region19: #{gnn_based_protein_forward.1} parent=1 // pred_check_branch
      %33 = sbr.rel (0) target = $region21
    $region20: #{gnn_based_protein_forward.1} parent=1 // pred_region
      _
    $region21: #{gnn_based_protein_forward.1} parent=1 // pred_fallthru
      _
    // Predicated region
    $region22: #{gnn_based_protein_forward.1} parent=1 // pred_check
      _
    $region23: #{gnn_based_protein_forward.1} parent=1 // pred_check_branch
      %35 = sbr.rel (0) target = $region25
    $region24: #{gnn_based_protein_forward.1} parent=1 // pred_region
      _
    $region25: #{gnn_based_protein_forward.1} parent=1 // pred_fallthru
      _
    // Predicated region
    $region26: #{gnn_based_protein_forward.1} parent=1 // pred_check
      _
    $region27: #{gnn_based_protein_forward.1} parent=1 // pred_check_branch
      %37 = sbr.rel (0) target = $region29
    $region28: #{gnn_based_protein_forward.1} parent=1 // pred_region
      _
    $region29: #{gnn_based_protein_forward.1} parent=1 // pred_fallthru
      _
    // Predicated region
    $region30: #{gnn_based_protein_forward.1} parent=1 // pred_check
      _
    $region31: #{gnn_based_protein_forward.1} parent=1 // pred_check_branch
      %39 = sbr.rel (0) target = $region33
    $region32: #{gnn_based_protein_forward.1} parent=1 // pred_region
      _
    $region33: #{gnn_based_protein_forward.1} parent=1 // pred_fallthru
      _
    // Predicated region
    $region34: #{gnn_based_protein_forward.1} parent=1 // pred_check
      _
    $region35: #{gnn_based_protein_forward.1} parent=1 // pred_check_branch
      %41 = sbr.rel (0) target = $region37
    $region36: #{gnn_based_protein_forward.1} parent=1 // pred_region
      %s43 = ssub.s32 2048, 2048
      %44 = vsyncadd [#allocation5], %s43
      %s45 = sshll.u32 [#allocation4], 4
      %s46 = int_to_ptr.vmem [resolvable:$true] %s45
      %51 = dma.hbm_to_vmem [thread:$0]  %s8, 2048, %s46, [#allocation5], 128, 128, 8
    $region37: #{gnn_based_protein_forward.1} parent=1 // pred_fallthru
      _
    // Predicated region
    $region38: #{gnn_based_protein_forward.1} parent=1 // pred_check
      _
    $region39: #{gnn_based_protein_forward.1} parent=1 // pred_check_branch
      %53 = sbr.rel (0) target = $region41
    $region40: #{gnn_based_protein_forward.1} parent=1 // pred_region
      %s55 = ssub.s32 2048, 2048
      %56 = vsyncadd [#allocation8], %s55
      %s57 = sshll.u32 [#allocation7], 4
      %s58 = int_to_ptr.vmem [resolvable:$true] %s57
      %63 = dma.hbm_to_vmem [thread:$0]  %s9, 2048, %s58, [#allocation8], 128, 128, 8
    $region41: #{gnn_based_protein_forward.1} parent=1 // pred_fallthru
      _
    // Predicated region
    $region42: #{gnn_based_protein_forward.1} parent=1 // pred_check
      _
    $region43: #{gnn_based_protein_forward.1} parent=1 // pred_check_branch
      %65 = sbr.rel (0) target = $region45
    $region44: #{gnn_based_protein_forward.1} parent=1 // pred_region
      %s67 = ssub.s32 2048, 2048
      %68 = vsyncadd [#allocation8], %s67
      %s69 = sshll.u32 [#allocation9], 4
      %s70 = int_to_ptr.vmem [resolvable:$true] %s69
      %75 = dma.hbm_to_vmem [thread:$0]  %s10, 2048, %s70, [#allocation8], 128, 128, 8
    $region45: #{gnn_based_protein_forward.1} parent=1 // pred_fallthru
      _
    // Predicated region
    $region46: #{gnn_based_protein_forward.1} parent=1 // pred_check
      _
    $region47: #{gnn_based_protein_forward.1} parent=1 // pred_check_branch
      %77 = sbr.rel (0) target = $region49
    $region48: #{gnn_based_protein_forward.1} parent=1 // pred_region
      %s79 = ssub.s32 2048, 2048
      %80 = vsyncadd [#allocation11], %s79
      %s81 = sshll.u32 [#allocation10], 4
      %s82 = int_to_ptr.vmem [resolvable:$true] %s81
      %87 = dma.hbm_to_vmem [thread:$0]  %s11, 2048, %s82, [#allocation11], 128, 128, 8
    $region49: #{gnn_based_protein_forward.1} parent=1 // pred_fallthru
      _
    // Predicated region
    $region50: #{gnn_based_protein_forward.1} parent=1 // pred_check
      _
    $region51: #{gnn_based_protein_forward.1} parent=1 // pred_check_branch
      %89 = sbr.rel (0) target = $region53
    $region52: #{gnn_based_protein_forward.1} parent=1 // pred_region
      %s91 = ssub.s32 2048, 2048
      %92 = vsyncadd [#allocation11], %s91
      %s93 = sshll.u32 [#allocation12], 4
      %s94 = int_to_ptr.vmem [resolvable:$true] %s93
      %99 = dma.hbm_to_vmem [thread:$0]  %s12, 2048, %s94, [#allocation11], 128, 128, 8
    $region53: #{gnn_based_protein_forward.1} parent=1 // pred_fallthru
      _
    // Predicated region
    $region54: #{gnn_based_protein_forward.1} parent=1 // pred_check
      _
    $region55: #{gnn_based_protein_forward.1} parent=1 // pred_check_branch
      %101 = sbr.rel (0) target = $region57
    $region56: #{gnn_based_protein_forward.1} parent=1 // pred_region
      %s103 = ssub.s32 2048, 2048
      %104 = vsyncadd [#allocation14], %s103
      %s105 = sshll.u32 [#allocation13], 4
      %s106 = int_to_ptr.vmem [resolvable:$true] %s105
      %111 = dma.hbm_to_vmem [thread:$0]  %s13, 2048, %s106, [#allocation14], 128, 128, 8
    $region57: #{gnn_based_protein_forward.1} parent=1 // pred_fallthru
      _
    // Predicated region
    $region58: #{gnn_based_protein_forward.1} parent=1 // pred_check
      _
    $region59: #{gnn_based_protein_forward.1} parent=1 // pred_check_branch
      %113 = sbr.rel (0) target = $region61
    $region60: #{gnn_based_protein_forward.1} parent=1 // pred_region
      %114 = dma.done [#allocation5], 2048
    $region61: #{gnn_based_protein_forward.1} parent=1 // pred_fallthru
      _
    // Predicated region
    $region62: #{gnn_based_protein_forward.1} parent=1 // pred_check
      _
    $region63: #{gnn_based_protein_forward.1} parent=1 // pred_check_branch
      %116 = sbr.rel (0) target = $region65
    $region64: #{gnn_based_protein_forward.1} parent=1 // pred_region
      %117 = dma.done [#allocation8], 2048
    $region65: #{gnn_based_protein_forward.1} parent=1 // pred_fallthru
      _
    // Predicated region
    $region66: #{gnn_based_protein_forward.1} parent=1 // pred_check
      _
    $region67: #{gnn_based_protein_forward.1} parent=1 // pred_check_branch
      %119 = sbr.rel (0) target = $region69
    $region68: #{gnn_based_protein_forward.1} parent=1 // pred_region
      %120 = dma.done [#allocation8], 2048
    $region69: #{gnn_based_protein_forward.1} parent=1 // pred_fallthru
      _
    // Predicated region
    $region70: #{gnn_based_protein_forward.1} parent=1 // pred_check
      _
    $region71: #{gnn_based_protein_forward.1} parent=1 // pred_check_branch
      %122 = sbr.rel (0) target = $region73
    $region72: #{gnn_based_protein_forward.1} parent=1 // pred_region
      %123 = dma.done [#allocation11], 2048
    $region73: #{gnn_based_protein_forward.1} parent=1 // pred_fallthru
      _
    // Predicated region
    $region74: #{gnn_based_protein_forward.1} parent=1 // pred_check
      _
    $region75: #{gnn_based_protein_forward.1} parent=1 // pred_check_branch
      %125 = sbr.rel (0) target = $region77
    $region76: #{gnn_based_protein_forward.1} parent=1 // pred_region
      %126 = dma.done [#allocation11], 2048
    $region77: #{gnn_based_protein_forward.1} parent=1 // pred_fallthru
      _
    // Predicated region
    $region78: #{gnn_based_protein_forward.1} parent=1 // pred_check
      _
    $region79: #{gnn_based_protein_forward.1} parent=1 // pred_check_branch
      %128 = sbr.rel (0) target = $region81
    $region80: #{gnn_based_protein_forward.1} parent=1 // pred_region
      %129 = dma.done [#allocation14], 2048
    $region81: #{gnn_based_protein_forward.1} parent=1 // pred_fallthru
      _
    %v130 = vld [vmem:[%s0] sm:$0xff]
    %v131 = vld [vmem:[%s0 + $0x8] sm:$0xff]
    %v132 = vld [vmem:[%s1] sm:$0xff]
    %v133 = vld [vmem:[%s1 + $0x8] sm:$0xff]
    %v134 = vld [vmem:[%s1 + $0x10] sm:$0xff]
    %v135 = vld [vmem:[%s1 + $0x18] sm:$0xff]
    %v136 = vlaneseq
    %v137 = vand.u32 %v136, 127
    %vm138 = vcmp.lt.s32.totalorder %v137, 32
    %v139 = vsel %vm138, 1, 0
    %v140 = vcvt.s32.f32 %v139
    %v141 = vld [vmem:[%s2] sm:$0xff]
    %v142 = vld [vmem:[%s2 + $0x8] sm:$0xff]
    %v143 = vld [vmem:[%s3] sm:$0xff]
    %v144 = vld [vmem:[%s3 + $0x8] sm:$0xff]
    %v145 = vld [vmem:[%s3 + $0x10] sm:$0xff]
    %v146 = vld [vmem:[%s3 + $0x18] sm:$0xff]
    %v147 = vld [vmem:[%s4] sm:$0xff]
    %v148 = vld [vmem:[%s4 + $0x8] sm:$0xff]
    %v149 = vld [vmem:[%s4 + $0x10] sm:$0xff]
    %v150 = vld [vmem:[%s4 + $0x18] sm:$0xff]
    %v151 = vld [vmem:[%s4 + $0x20] sm:$0xff]
    %v152 = vld [vmem:[%s4 + $0x28] sm:$0xff]
    %v153 = vld [vmem:[%s4 + $0x30] sm:$0xff]
    %v154 = vld [vmem:[%s4 + $0x38] sm:$0xff]
    %v155 = vld [vmem:[%s4 + $0x40] sm:$0xff]
    %v156 = vld [vmem:[%s4 + $0x48] sm:$0xff]
    %v157 = vld [vmem:[%s4 + $0x50] sm:$0xff]
    %v158 = vld [vmem:[%s4 + $0x58] sm:$0xff]
    %v159 = vld [vmem:[%s4 + $0x60] sm:$0xff]
    %v160 = vld [vmem:[%s4 + $0x68] sm:$0xff]
    %v161 = vld [vmem:[%s4 + $0x70] sm:$0xff]
    %v162 = vld [vmem:[%s4 + $0x78] sm:$0xff]
    %v163 = vld [vmem:[%s5] sm:$0xff]
    %v164 = vld [vmem:[%s5 + $0x8] sm:$0xff]
    %v165 = vld [vmem:[%s5 + $0x10] sm:$0xff]
    %v166 = vld [vmem:[%s5 + $0x18] sm:$0xff]
    %v167 = vld [vmem:[%s5 + $0x20] sm:$0xff]
    %v168 = vld [vmem:[%s5 + $0x28] sm:$0xff]
    %v169 = vld [vmem:[%s5 + $0x30] sm:$0xff]
    %v170 = vld [vmem:[%s5 + $0x38] sm:$0xff]
    %v171 = vld [vmem:[%s5 + $0x40] sm:$0xff]
    %v172 = vld [vmem:[%s5 + $0x48] sm:$0xff]
    %v173 = vld [vmem:[%s5 + $0x50] sm:$0xff]
    %v174 = vld [vmem:[%s5 + $0x58] sm:$0xff]
    %v175 = vld [vmem:[%s5 + $0x60] sm:$0xff]
    %v176 = vld [vmem:[%s5 + $0x68] sm:$0xff]
    %v177 = vld [vmem:[%s5 + $0x70] sm:$0xff]
    %v178 = vld [vmem:[%s5 + $0x78] sm:$0xff]
    %v179 = vld [vmem:[%s6] sm:$0xff]
    %v180 = vld [vmem:[%s6 + $0x8] sm:$0xff]
    %v181 = vld [vmem:[%s6 + $0x10] sm:$0xff]
    %v182 = vld [vmem:[%s6 + $0x18] sm:$0xff]
    %v183 = vld [vmem:[%s6 + $0x20] sm:$0xff]
    %v184 = vld [vmem:[%s6 + $0x28] sm:$0xff]
    %v185 = vld [vmem:[%s6 + $0x30] sm:$0xff]
    %v186 = vld [vmem:[%s6 + $0x38] sm:$0xff]
    %v187 = vld [vmem:[%s6 + $0x40] sm:$0xff]
    %v188 = vld [vmem:[%s6 + $0x48] sm:$0xff]
    %v189 = vld [vmem:[%s6 + $0x50] sm:$0xff]
    %v190 = vld [vmem:[%s6 + $0x58] sm:$0xff]
    %v191 = vld [vmem:[%s6 + $0x60] sm:$0xff]
    %v192 = vld [vmem:[%s6 + $0x68] sm:$0xff]
    %v193 = vld [vmem:[%s6 + $0x70] sm:$0xff]
    %v194 = vld [vmem:[%s6 + $0x78] sm:$0xff]
    %v195 = vld [vmem:[%s7] sm:$0xff]
    %v196 = vld [vmem:[%s7 + $0x8] sm:$0xff]
    %v197 = vld [vmem:[%s7 + $0x10] sm:$0xff]
    %v198 = vld [vmem:[%s7 + $0x18] sm:$0xff]
    %v199 = vld [vmem:[%s7 + $0x20] sm:$0xff]
    %v200 = vld [vmem:[%s7 + $0x28] sm:$0xff]
    %v201 = vld [vmem:[%s7 + $0x30] sm:$0xff]
    %v202 = vld [vmem:[%s7 + $0x38] sm:$0xff]
    %v203 = vld [vmem:[%s7 + $0x40] sm:$0xff]
    %v204 = vld [vmem:[%s7 + $0x48] sm:$0xff]
    %v205 = vld [vmem:[%s7 + $0x50] sm:$0xff]
    %v206 = vld [vmem:[%s7 + $0x58] sm:$0xff]
    %v207 = vld [vmem:[%s7 + $0x60] sm:$0xff]
    %v208 = vld [vmem:[%s7 + $0x68] sm:$0xff]
    %v209 = vld [vmem:[%s7 + $0x70] sm:$0xff]
    %v210 = vld [vmem:[%s7 + $0x78] sm:$0xff]
    %v211 = vld [vmem:[#allocation4] sm:$0xff]
    %v212 = vld [vmem:[#allocation4 + $0x8] sm:$0xff]
    %v213 = vld [vmem:[#allocation4 + $0x10] sm:$0xff]
    %v214 = vld [vmem:[#allocation4 + $0x18] sm:$0xff]
    %v215 = vld [vmem:[#allocation4 + $0x20] sm:$0xff]
    %v216 = vld [vmem:[#allocation4 + $0x28] sm:$0xff]
    %v217 = vld [vmem:[#allocation4 + $0x30] sm:$0xff]
    %v218 = vld [vmem:[#allocation4 + $0x38] sm:$0xff]
    %v219 = vld [vmem:[#allocation4 + $0x40] sm:$0xff]
    %v220 = vld [vmem:[#allocation4 + $0x48] sm:$0xff]
    %v221 = vld [vmem:[#allocation4 + $0x50] sm:$0xff]
    %v222 = vld [vmem:[#allocation4 + $0x58] sm:$0xff]
    %v223 = vld [vmem:[#allocation4 + $0x60] sm:$0xff]
    %v224 = vld [vmem:[#allocation4 + $0x68] sm:$0xff]
    %v225 = vld [vmem:[#allocation4 + $0x70] sm:$0xff]
    %v226 = vld [vmem:[#allocation4 + $0x78] sm:$0xff]
    %227 = vmatprep.subr.mxu0 0.0
    %228 = vmatpush1.msra.mxu0 %v147
    %229 = vmatprep.subr.mxu0 0.0
    %230 = vmatpush1.msra.mxu0 %v148
    %231 = vmatprep.subr.mxu0 0.0
    %232 = vmatpush1.msra.mxu0 %v149
    %233 = vmatprep.subr.mxu0 0.0
    %234 = vmatpush1.msra.mxu0 %v150
    %235 = vmatprep.subr.mxu0 0.0
    %236 = vmatpush1.msra.mxu0 %v151
    %237 = vmatprep.subr.mxu0 0.0
    %238 = vmatpush1.msra.mxu0 %v152
    %239 = vmatprep.subr.mxu0 0.0
    %240 = vmatpush1.msra.mxu0 %v153
    %241 = vmatprep.subr.mxu0 0.0
    %242 = vmatpush1.msra.mxu0 %v154
    %243 = vmatprep.subr.mxu0 0.0
    %244 = vmatpush1.msra.mxu0 %v155
    %245 = vmatprep.subr.mxu0 0.0
    %246 = vmatpush1.msra.mxu0 %v156
    %247 = vmatprep.subr.mxu0 0.0
    %248 = vmatpush1.msra.mxu0 %v157
    %249 = vmatprep.subr.mxu0 0.0
    %250 = vmatpush1.msra.mxu0 %v158
    %251 = vmatprep.subr.mxu0 0.0
    %252 = vmatpush1.msra.mxu0 %v159
    %253 = vmatprep.subr.mxu0 0.0
    %254 = vmatpush1.msra.mxu0 %v160
    %255 = vmatprep.subr.mxu0 0.0
    %256 = vmatpush1.msra.mxu0 %v161
    %257 = vmatprep.subr.mxu0 0.0
    %258 = vmatpush1.msra.mxu0 %v162
    %259 = vmatprep.subr.mxu0 0.0
    %260 = vmatpush1.msra.mxu0 0.0
    %261 = vmatprep.subr.mxu0 0.0
    %262 = vmatpush1.msra.mxu0 0.0
    %263 = vmatprep.subr.mxu0 0.0
    %264 = vmatpush1.msra.mxu0 0.0
    %265 = vmatprep.subr.mxu0 0.0
    %266 = vmatpush1.msra.mxu0 0.0
    %267 = vmatprep.subr.mxu0 0.0
    %268 = vmatpush1.msra.mxu0 0.0
    %269 = vmatprep.subr.mxu0 0.0
    %270 = vmatpush1.msra.mxu0 0.0
    %271 = vmatprep.subr.mxu0 0.0
    %272 = vmatpush1.msra.mxu0 0.0
    %273 = vmatprep.subr.mxu0 0.0
    %274 = vmatpush1.msra.mxu0 0.0
    %275 = vmatprep.subr.mxu0 0.0
    %276 = vmatpush1.msra.mxu0 0.0
    %277 = vmatprep.subr.mxu0 0.0
    %278 = vmatpush1.msra.mxu0 0.0
    %279 = vmatprep.subr.mxu0 0.0
    %280 = vmatpush1.msra.mxu0 0.0
    %281 = vmatprep.subr.mxu0 0.0
    %282 = vmatpush1.msra.mxu0 0.0
    %283 = vmatprep.subr.mxu0 0.0
    %284 = vmatpush1.msra.mxu0 0.0
    %285 = vmatprep.subr.mxu0 0.0
    %286 = vmatpush1.msra.mxu0 0.0
    %287 = vmatprep.subr.mxu0 0.0
    %288 = vmatpush1.msra.mxu0 0.0
    %289 = vmatprep.subr.mxu0 0.0
    %290 = vmatpush1.msra.mxu0 0.0
    %291 = vmatprep.mubr.f32.mxu0 0.0
    %292 = vmatmul.mubr.f32.gmra.mrb[0].mxu0 %v141
    %v293 = vpop.f32.mrb[0].mxu0
    %v294 = vadd.f32 0.0, %v293
    %v295 = vpop.f32.mrb[0].mxu0
    %296 = vmatprep.mubr.f32.mxu0 0.0
    %297 = vmatmul.mubr.f32.gmra.mrb[0].mxu0 %v142
    %v298 = vpop.f32.mrb[0].mxu0
    %v299 = vadd.f32 0.0, %v298
    %v300 = vpop.f32.mrb[0].mxu0
    %301 = vdwg.mxu0
    %302 = vst [vmem:[#allocation2] sm:$0xff] %v294
    %303 = vst [vmem:[#allocation2 + $0x8] sm:$0xff] %v299
    %304 = vmatprep.subr.mxu0 0.0
    %305 = vmatpush1.msra.mxu0 %v163
    %306 = vmatprep.subr.mxu0 0.0
    %307 = vmatpush1.msra.mxu0 %v164
    %308 = vmatprep.subr.mxu0 0.0
    %309 = vmatpush1.msra.mxu0 %v165
    %310 = vmatprep.subr.mxu0 0.0
    %311 = vmatpush1.msra.mxu0 %v166
    %312 = vmatprep.subr.mxu0 0.0
    %313 = vmatpush1.msra.mxu0 %v167
    %314 = vmatprep.subr.mxu0 0.0
    %315 = vmatpush1.msra.mxu0 %v168
    %316 = vmatprep.subr.mxu0 0.0
    %317 = vmatpush1.msra.mxu0 %v169
    %318 = vmatprep.subr.mxu0 0.0
    %319 = vmatpush1.msra.mxu0 %v170
    %320 = vmatprep.subr.mxu0 0.0
    %321 = vmatpush1.msra.mxu0 %v171
    %322 = vmatprep.subr.mxu0 0.0
    %323 = vmatpush1.msra.mxu0 %v172
    %324 = vmatprep.subr.mxu0 0.0
    %325 = vmatpush1.msra.mxu0 %v173
    %326 = vmatprep.subr.mxu0 0.0
    %327 = vmatpush1.msra.mxu0 %v174
    %328 = vmatprep.subr.mxu0 0.0
    %329 = vmatpush1.msra.mxu0 %v175
    %330 = vmatprep.subr.mxu0 0.0
    %331 = vmatpush1.msra.mxu0 %v176
    %332 = vmatprep.subr.mxu0 0.0
    %333 = vmatpush1.msra.mxu0 %v177
    %334 = vmatprep.subr.mxu0 0.0
    %335 = vmatpush1.msra.mxu0 %v178
    %336 = vmatprep.subr.mxu0 0.0
    %337 = vmatpush1.msra.mxu0 0.0
    %338 = vmatprep.subr.mxu0 0.0
    %339 = vmatpush1.msra.mxu0 0.0
    %340 = vmatprep.subr.mxu0 0.0
    %341 = vmatpush1.msra.mxu0 0.0
    %342 = vmatprep.subr.mxu0 0.0
    %343 = vmatpush1.msra.mxu0 0.0
    %344 = vmatprep.subr.mxu0 0.0
    %345 = vmatpush1.msra.mxu0 0.0
    %346 = vmatprep.subr.mxu0 0.0
    %347 = vmatpush1.msra.mxu0 0.0
    %348 = vmatprep.subr.mxu0 0.0
    %349 = vmatpush1.msra.mxu0 0.0
    %350 = vmatprep.subr.mxu0 0.0
    %351 = vmatpush1.msra.mxu0 0.0
    %352 = vmatprep.subr.mxu0 0.0
    %353 = vmatpush1.msra.mxu0 0.0
    %354 = vmatprep.subr.mxu0 0.0
    %355 = vmatpush1.msra.mxu0 0.0
    %356 = vmatprep.subr.mxu0 0.0
    %357 = vmatpush1.msra.mxu0 0.0
    %358 = vmatprep.subr.mxu0 0.0
    %359 = vmatpush1.msra.mxu0 0.0
    %360 = vmatprep.subr.mxu0 0.0
    %361 = vmatpush1.msra.mxu0 0.0
    %362 = vmatprep.subr.mxu0 0.0
    %363 = vmatpush1.msra.mxu0 0.0
    %364 = vmatprep.subr.mxu0 0.0
    %365 = vmatpush1.msra.mxu0 0.0
    %366 = vmatprep.subr.mxu0 0.0
    %367 = vmatpush1.msra.mxu0 0.0
    %368 = vmatprep.mubr.f32.mxu0 0.0
    %369 = vmatmul.mubr.f32.gmra.mrb[0].mxu0 %v143
    %v370 = vpop.f32.mrb[0].mxu0
    %v371 = vadd.f32 0.0, %v370
    %v372 = vpop.f32.mrb[0].mxu0
    %373 = vmatprep.mubr.f32.mxu0 0.0
    %374 = vmatmul.mubr.f32.gmra.mrb[0].mxu0 %v144
    %v375 = vpop.f32.mrb[0].mxu0
    %v376 = vadd.f32 0.0, %v375
    %v377 = vpop.f32.mrb[0].mxu0
    %378 = vdwg.mxu0
    %379 = vst [vmem:[#allocation2 + $0x10] sm:$0xff] %v371
    %380 = vst [vmem:[#allocation2 + $0x18] sm:$0xff] %v376
    %v381 = vld [vmem:[#allocation2] sm:$0xff]
    %v382 = vld [vmem:[#allocation2 + $0x8] sm:$0xff]
    %v383 = vld [vmem:[#allocation2 + $0x10] sm:$0xff]
    %v384 = vld [vmem:[#allocation2 + $0x18] sm:$0xff]
    %385 = vmatprep.subr.mxu0 0.0
    %386 = vmatpush1.msra.mxu0 %v211
    %387 = vmatprep.subr.mxu0 0.0
    %388 = vmatpush1.msra.mxu0 %v212
    %389 = vmatprep.subr.mxu0 0.0
    %390 = vmatpush1.msra.mxu0 %v213
    %391 = vmatprep.subr.mxu0 0.0
    %392 = vmatpush1.msra.mxu0 %v214
    %393 = vmatprep.subr.mxu0 0.0
    %394 = vmatpush1.msra.mxu0 %v215
    %395 = vmatprep.subr.mxu0 0.0
    %396 = vmatpush1.msra.mxu0 %v216
    %397 = vmatprep.subr.mxu0 0.0
    %398 = vmatpush1.msra.mxu0 %v217
    %399 = vmatprep.subr.mxu0 0.0
    %400 = vmatpush1.msra.mxu0 %v218
    %401 = vmatprep.subr.mxu0 0.0
    %402 = vmatpush1.msra.mxu0 %v219
    %403 = vmatprep.subr.mxu0 0.0
    %404 = vmatpush1.msra.mxu0 %v220
    %405 = vmatprep.subr.mxu0 0.0
    %406 = vmatpush1.msra.mxu0 %v221
    %407 = vmatprep.subr.mxu0 0.0
    %408 = vmatpush1.msra.mxu0 %v222
    %409 = vmatprep.subr.mxu0 0.0
    %410 = vmatpush1.msra.mxu0 %v223
    %411 = vmatprep.subr.mxu0 0.0
    %412 = vmatpush1.msra.mxu0 %v224
    %413 = vmatprep.subr.mxu0 0.0
    %414 = vmatpush1.msra.mxu0 %v225
    %415 = vmatprep.subr.mxu0 0.0
    %416 = vmatpush1.msra.mxu0 %v226
    %417 = vmatprep.subr.mxu0 0.0
    %418 = vmatpush1.msra.mxu0 0.0
    %419 = vmatprep.subr.mxu0 0.0
    %420 = vmatpush1.msra.mxu0 0.0
    %421 = vmatprep.subr.mxu0 0.0
    %422 = vmatpush1.msra.mxu0 0.0
    %423 = vmatprep.subr.mxu0 0.0
    %424 = vmatpush1.msra.mxu0 0.0
    %425 = vmatprep.subr.mxu0 0.0
    %426 = vmatpush1.msra.mxu0 0.0
    %427 = vmatprep.subr.mxu0 0.0
    %428 = vmatpush1.msra.mxu0 0.0
    %429 = vmatprep.subr.mxu0 0.0
    %430 = vmatpush1.msra.mxu0 0.0
    %431 = vmatprep.subr.mxu0 0.0
    %432 = vmatpush1.msra.mxu0 0.0
    %433 = vmatprep.subr.mxu0 0.0
    %434 = vmatpush1.msra.mxu0 0.0
    %435 = vmatprep.subr.mxu0 0.0
    %436 = vmatpush1.msra.mxu0 0.0
    %437 = vmatprep.subr.mxu0 0.0
    %438 = vmatpush1.msra.mxu0 0.0
    %439 = vmatprep.subr.mxu0 0.0
    %440 = vmatpush1.msra.mxu0 0.0
    %441 = vmatprep.subr.mxu0 0.0
    %442 = vmatpush1.msra.mxu0 0.0
    %443 = vmatprep.subr.mxu0 0.0
    %444 = vmatpush1.msra.mxu0 0.0
    %445 = vmatprep.subr.mxu0 0.0
    %446 = vmatpush1.msra.mxu0 0.0
    %447 = vmatprep.subr.mxu0 0.0
    %448 = vmatpush1.msra.mxu0 0.0
    %449 = vmatprep.mubr.f32.mxu0 0.0
    %450 = vmatmul.mubr.f32.gmra.mrb[0].mxu0 %v141
    %v451 = vpop.f32.mrb[0].mxu0
    %v452 = vadd.f32 0.0, %v451
    %v453 = vpop.f32.mrb[0].mxu0
    %454 = vmatprep.mubr.f32.mxu0 0.0
    %455 = vmatmul.mubr.f32.gmra.mrb[0].mxu0 %v142
    %v456 = vpop.f32.mrb[0].mxu0
    %v457 = vadd.f32 0.0, %v456
    %v458 = vpop.f32.mrb[0].mxu0
    %459 = vdwg.mxu0
    %vm460 = vcmask 261120
    %v462 = vsel %vm460, %v130, 0
    %v465 = vsel %vm460, %v131, 0
    %467 = vmatprep.subr.mxu0 0.0
    %468 = vmatpush1.msra.mxu0 %v381
    %469 = vmatprep.subr.mxu0 0.0
    %470 = vmatpush1.msra.mxu0 %v382
    %471 = vmatprep.subr.mxu0 0.0
    %472 = vmatpush1.msra.mxu0 %v383
    %473 = vmatprep.subr.mxu0 0.0
    %474 = vmatpush1.msra.mxu0 %v384
    %475 = vmatprep.subr.mxu0 0.0
    %476 = vmatpush1.msra.mxu0 0.0
    %477 = vmatprep.subr.mxu0 0.0
    %478 = vmatpush1.msra.mxu0 0.0
    %479 = vmatprep.subr.mxu0 0.0
    %480 = vmatpush1.msra.mxu0 0.0
    %481 = vmatprep.subr.mxu0 0.0
    %482 = vmatpush1.msra.mxu0 0.0
    %483 = vmatprep.subr.mxu0 0.0
    %484 = vmatpush1.msra.mxu0 0.0
    %485 = vmatprep.subr.mxu0 0.0
    %486 = vmatpush1.msra.mxu0 0.0
    %487 = vmatprep.subr.mxu0 0.0
    %488 = vmatpush1.msra.mxu0 0.0
    %489 = vmatprep.subr.mxu0 0.0
    %490 = vmatpush1.msra.mxu0 0.0
    %491 = vmatprep.subr.mxu0 0.0
    %492 = vmatpush1.msra.mxu0 0.0
    %493 = vmatprep.subr.mxu0 0.0
    %494 = vmatpush1.msra.mxu0 0.0
    %495 = vmatprep.subr.mxu0 0.0
    %496 = vmatpush1.msra.mxu0 0.0
    %497 = vmatprep.subr.mxu0 0.0
    %498 = vmatpush1.msra.mxu0 0.0
    %499 = vmatprep.subr.mxu0 0.0
    %500 = vmatpush1.msra.mxu0 0.0
    %501 = vmatprep.subr.mxu0 0.0
    %502 = vmatpush1.msra.mxu0 0.0
    %503 = vmatprep.subr.mxu0 0.0
    %504 = vmatpush1.msra.mxu0 0.0
    %505 = vmatprep.subr.mxu0 0.0
    %506 = vmatpush1.msra.mxu0 0.0
    %507 = vmatprep.subr.mxu0 0.0
    %508 = vmatpush1.msra.mxu0 0.0
    %509 = vmatprep.subr.mxu0 0.0
    %510 = vmatpush1.msra.mxu0 0.0
    %511 = vmatprep.subr.mxu0 0.0
    %512 = vmatpush1.msra.mxu0 0.0
    %513 = vmatprep.subr.mxu0 0.0
    %514 = vmatpush1.msra.mxu0 0.0
    %515 = vmatprep.subr.mxu0 0.0
    %516 = vmatpush1.msra.mxu0 0.0
    %517 = vmatprep.subr.mxu0 0.0
    %518 = vmatpush1.msra.mxu0 0.0
    %519 = vmatprep.subr.mxu0 0.0
    %520 = vmatpush1.msra.mxu0 0.0
    %521 = vmatprep.subr.mxu0 0.0
    %522 = vmatpush1.msra.mxu0 0.0
    %523 = vmatprep.subr.mxu0 0.0
    %524 = vmatpush1.msra.mxu0 0.0
    %525 = vmatprep.subr.mxu0 0.0
    %526 = vmatpush1.msra.mxu0 0.0
    %527 = vmatprep.subr.mxu0 0.0
    %528 = vmatpush1.msra.mxu0 0.0
    %529 = vmatprep.subr.mxu0 0.0
    %530 = vmatpush1.msra.mxu0 0.0
    %531 = vmatprep.mubr.f32.mxu0 0.0
    %532 = vmatmul.mubr.f32.gmra.mrb[0].mxu0 %v462
    %v533 = vpop.f32.mrb[0].mxu0
    %v534 = vadd.f32 %v452, %v533
    %v535 = vpop.f32.mrb[0].mxu0
    %536 = vmatprep.mubr.f32.mxu0 0.0
    %537 = vmatmul.mubr.f32.gmra.mrb[0].mxu0 %v465
    %v538 = vpop.f32.mrb[0].mxu0
    %v539 = vadd.f32 %v457, %v538
    %v540 = vpop.f32.mrb[0].mxu0
    %541 = vdwg.mxu0
    %v542 = vadd.f32 %v534, 1e-06
    %v543 = vadd.f32 %v539, 1e-06
    %544 = vmatprep.subr.mxu0 0.0
    %545 = vmatpush1.msra.mxu0 %v195
    %546 = vmatprep.subr.mxu0 0.0
    %547 = vmatpush1.msra.mxu0 %v196
    %548 = vmatprep.subr.mxu0 0.0
    %549 = vmatpush1.msra.mxu0 %v197
    %550 = vmatprep.subr.mxu0 0.0
    %551 = vmatpush1.msra.mxu0 %v198
    %552 = vmatprep.subr.mxu0 0.0
    %553 = vmatpush1.msra.mxu0 %v199
    %554 = vmatprep.subr.mxu0 0.0
    %555 = vmatpush1.msra.mxu0 %v200
    %556 = vmatprep.subr.mxu0 0.0
    %557 = vmatpush1.msra.mxu0 %v201
    %558 = vmatprep.subr.mxu0 0.0
    %559 = vmatpush1.msra.mxu0 %v202
    %560 = vmatprep.subr.mxu0 0.0
    %561 = vmatpush1.msra.mxu0 %v203
    %562 = vmatprep.subr.mxu0 0.0
    %563 = vmatpush1.msra.mxu0 %v204
    %564 = vmatprep.subr.mxu0 0.0
    %565 = vmatpush1.msra.mxu0 %v205
    %566 = vmatprep.subr.mxu0 0.0
    %567 = vmatpush1.msra.mxu0 %v206
    %568 = vmatprep.subr.mxu0 0.0
    %569 = vmatpush1.msra.mxu0 %v207
    %570 = vmatprep.subr.mxu0 0.0
    %571 = vmatpush1.msra.mxu0 %v208
    %572 = vmatprep.subr.mxu0 0.0
    %573 = vmatpush1.msra.mxu0 %v209
    %574 = vmatprep.subr.mxu0 0.0
    %575 = vmatpush1.msra.mxu0 %v210
    %576 = vmatprep.subr.mxu0 0.0
    %577 = vmatpush1.msra.mxu0 0.0
    %578 = vmatprep.subr.mxu0 0.0
    %579 = vmatpush1.msra.mxu0 0.0
    %580 = vmatprep.subr.mxu0 0.0
    %581 = vmatpush1.msra.mxu0 0.0
    %582 = vmatprep.subr.mxu0 0.0
    %583 = vmatpush1.msra.mxu0 0.0
    %584 = vmatprep.subr.mxu0 0.0
    %585 = vmatpush1.msra.mxu0 0.0
    %586 = vmatprep.subr.mxu0 0.0
    %587 = vmatpush1.msra.mxu0 0.0
    %588 = vmatprep.subr.mxu0 0.0
    %589 = vmatpush1.msra.mxu0 0.0
    %590 = vmatprep.subr.mxu0 0.0
    %591 = vmatpush1.msra.mxu0 0.0
    %592 = vmatprep.subr.mxu0 0.0
    %593 = vmatpush1.msra.mxu0 0.0
    %594 = vmatprep.subr.mxu0 0.0
    %595 = vmatpush1.msra.mxu0 0.0
    %596 = vmatprep.subr.mxu0 0.0
    %597 = vmatpush1.msra.mxu0 0.0
    %598 = vmatprep.subr.mxu0 0.0
    %599 = vmatpush1.msra.mxu0 0.0
    %600 = vmatprep.subr.mxu0 0.0
    %601 = vmatpush1.msra.mxu0 0.0
    %602 = vmatprep.subr.mxu0 0.0
    %603 = vmatpush1.msra.mxu0 0.0
    %604 = vmatprep.subr.mxu0 0.0
    %605 = vmatpush1.msra.mxu0 0.0
    %606 = vmatprep.subr.mxu0 0.0
    %607 = vmatpush1.msra.mxu0 0.0
    %608 = vmatprep.mubr.f32.mxu0 0.0
    %609 = vmatmul.mubr.f32.gmra.mrb[0].mxu0 %v143
    %v610 = vpop.f32.mrb[0].mxu0
    %v611 = vadd.f32 0.0, %v610
    %v612 = vpop.f32.mrb[0].mxu0
    %613 = vmatprep.mubr.f32.mxu0 0.0
    %614 = vmatmul.mubr.f32.gmra.mrb[0].mxu0 %v144
    %v615 = vpop.f32.mrb[0].mxu0
    %v616 = vadd.f32 0.0, %v615
    %v617 = vpop.f32.mrb[0].mxu0
    %618 = vmatprep.mubr.f32.mxu0 0.0
    %619 = vmatmul.mubr.f32.gmra.mrb[0].mxu0 %v145
    %v620 = vpop.f32.mrb[0].mxu0
    %v621 = vadd.f32 0.0, %v620
    %v622 = vpop.f32.mrb[0].mxu0
    %623 = vmatprep.mubr.f32.mxu0 0.0
    %624 = vmatmul.mubr.f32.gmra.mrb[0].mxu0 %v146
    %v625 = vpop.f32.mrb[0].mxu0
    %v626 = vadd.f32 0.0, %v625
    %v627 = vpop.f32.mrb[0].mxu0
    %628 = vdwg.mxu0
    %629 = vst [vmem:[#allocation3] sm:$0xff] %v611
    %630 = vst [vmem:[#allocation3 + $0x8] sm:$0xff] %v616
    %631 = vst [vmem:[#allocation3 + $0x10] sm:$0xff] %v621
    %632 = vst [vmem:[#allocation3 + $0x18] sm:$0xff] %v626
    %633 = vmatprep.subr.mxu0 0.0
    %634 = vmatpush1.msra.mxu0 %v179
    %635 = vmatprep.subr.mxu0 0.0
    %636 = vmatpush1.msra.mxu0 %v180
    %637 = vmatprep.subr.mxu0 0.0
    %638 = vmatpush1.msra.mxu0 %v181
    %639 = vmatprep.subr.mxu0 0.0
    %640 = vmatpush1.msra.mxu0 %v182
    %641 = vmatprep.subr.mxu0 0.0
    %642 = vmatpush1.msra.mxu0 %v183
    %643 = vmatprep.subr.mxu0 0.0
    %644 = vmatpush1.msra.mxu0 %v184
    %645 = vmatprep.subr.mxu0 0.0
    %646 = vmatpush1.msra.mxu0 %v185
    %647 = vmatprep.subr.mxu0 0.0
    %648 = vmatpush1.msra.mxu0 %v186
    %649 = vmatprep.subr.mxu0 0.0
    %650 = vmatpush1.msra.mxu0 %v187
    %651 = vmatprep.subr.mxu0 0.0
    %652 = vmatpush1.msra.mxu0 %v188
    %653 = vmatprep.subr.mxu0 0.0
    %654 = vmatpush1.msra.mxu0 %v189
    %655 = vmatprep.subr.mxu0 0.0
    %656 = vmatpush1.msra.mxu0 %v190
    %657 = vmatprep.subr.mxu0 0.0
    %658 = vmatpush1.msra.mxu0 %v191
    %659 = vmatprep.subr.mxu0 0.0
    %660 = vmatpush1.msra.mxu0 %v192
    %661 = vmatprep.subr.mxu0 0.0
    %662 = vmatpush1.msra.mxu0 %v193
    %663 = vmatprep.subr.mxu0 0.0
    %664 = vmatpush1.msra.mxu0 %v194
    %665 = vmatprep.subr.mxu0 0.0
    %666 = vmatpush1.msra.mxu0 0.0
    %667 = vmatprep.subr.mxu0 0.0
    %668 = vmatpush1.msra.mxu0 0.0
    %669 = vmatprep.subr.mxu0 0.0
    %670 = vmatpush1.msra.mxu0 0.0
    %671 = vmatprep.subr.mxu0 0.0
    %672 = vmatpush1.msra.mxu0 0.0
    %673 = vmatprep.subr.mxu0 0.0
    %674 = vmatpush1.msra.mxu0 0.0
    %675 = vmatprep.subr.mxu0 0.0
    %676 = vmatpush1.msra.mxu0 0.0
    %677 = vmatprep.subr.mxu0 0.0
    %678 = vmatpush1.msra.mxu0 0.0
    %679 = vmatprep.subr.mxu0 0.0
    %680 = vmatpush1.msra.mxu0 0.0
    %681 = vmatprep.subr.mxu0 0.0
    %682 = vmatpush1.msra.mxu0 0.0
    %683 = vmatprep.subr.mxu0 0.0
    %684 = vmatpush1.msra.mxu0 0.0
    %685 = vmatprep.subr.mxu0 0.0
    %686 = vmatpush1.msra.mxu0 0.0
    %687 = vmatprep.subr.mxu0 0.0
    %688 = vmatpush1.msra.mxu0 0.0
    %689 = vmatprep.subr.mxu0 0.0
    %690 = vmatpush1.msra.mxu0 0.0
    %691 = vmatprep.subr.mxu0 0.0
    %692 = vmatpush1.msra.mxu0 0.0
    %693 = vmatprep.subr.mxu0 0.0
    %694 = vmatpush1.msra.mxu0 0.0
    %695 = vmatprep.subr.mxu0 0.0
    %696 = vmatpush1.msra.mxu0 0.0
    %697 = vmatprep.mubr.f32.mxu0 0.0
    %698 = vmatmul.mubr.f32.gmra.mrb[0].mxu0 %v141
    %v699 = vpop.f32.mrb[0].mxu0
    %v700 = vadd.f32 0.0, %v699
    %v701 = vpop.f32.mrb[0].mxu0
    %702 = vmatprep.mubr.f32.mxu0 0.0
    %703 = vmatmul.mubr.f32.gmra.mrb[0].mxu0 %v142
    %v704 = vpop.f32.mrb[0].mxu0
    %v705 = vadd.f32 0.0, %v704
    %v706 = vpop.f32.mrb[0].mxu0
    %707 = vdwg.mxu0
    %708 = vst [vmem:[#allocation3 + $0x20] sm:$0xff] %v700
    %709 = vst [vmem:[#allocation3 + $0x28] sm:$0xff] %v705
    %v710 = vld [vmem:[#allocation3] sm:$0xff]
    %v711 = vld [vmem:[#allocation3 + $0x8] sm:$0xff]
    %v712 = vld [vmem:[#allocation3 + $0x10] sm:$0xff]
    %v713 = vld [vmem:[#allocation3 + $0x18] sm:$0xff]
    %v714 = vld [vmem:[#allocation3 + $0x20] sm:$0xff]
    %v715 = vld [vmem:[#allocation3 + $0x28] sm:$0xff]
    %716 = vmatprep.subr.mxu0 0.0
    %717 = vmatpush1.msra.mxu0 %v211
    %718 = vmatprep.subr.mxu0 0.0
    %719 = vmatpush1.msra.mxu0 %v212
    %720 = vmatprep.subr.mxu0 0.0
    %721 = vmatpush1.msra.mxu0 %v213
    %722 = vmatprep.subr.mxu0 0.0
    %723 = vmatpush1.msra.mxu0 %v214
    %724 = vmatprep.subr.mxu0 0.0
    %725 = vmatpush1.msra.mxu0 %v215
    %726 = vmatprep.subr.mxu0 0.0
    %727 = vmatpush1.msra.mxu0 %v216
    %728 = vmatprep.subr.mxu0 0.0
    %729 = vmatpush1.msra.mxu0 %v217
    %730 = vmatprep.subr.mxu0 0.0
    %731 = vmatpush1.msra.mxu0 %v218
    %732 = vmatprep.subr.mxu0 0.0
    %733 = vmatpush1.msra.mxu0 %v219
    %734 = vmatprep.subr.mxu0 0.0
    %735 = vmatpush1.msra.mxu0 %v220
    %736 = vmatprep.subr.mxu0 0.0
    %737 = vmatpush1.msra.mxu0 %v221
    %738 = vmatprep.subr.mxu0 0.0
    %739 = vmatpush1.msra.mxu0 %v222
    %740 = vmatprep.subr.mxu0 0.0
    %741 = vmatpush1.msra.mxu0 %v223
    %742 = vmatprep.subr.mxu0 0.0
    %743 = vmatpush1.msra.mxu0 %v224
    %744 = vmatprep.subr.mxu0 0.0
    %745 = vmatpush1.msra.mxu0 %v225
    %746 = vmatprep.subr.mxu0 0.0
    %747 = vmatpush1.msra.mxu0 %v226
    %748 = vmatprep.subr.mxu0 0.0
    %749 = vmatpush1.msra.mxu0 0.0
    %750 = vmatprep.subr.mxu0 0.0
    %751 = vmatpush1.msra.mxu0 0.0
    %752 = vmatprep.subr.mxu0 0.0
    %753 = vmatpush1.msra.mxu0 0.0
    %754 = vmatprep.subr.mxu0 0.0
    %755 = vmatpush1.msra.mxu0 0.0
    %756 = vmatprep.subr.mxu0 0.0
    %757 = vmatpush1.msra.mxu0 0.0
    %758 = vmatprep.subr.mxu0 0.0
    %759 = vmatpush1.msra.mxu0 0.0
    %760 = vmatprep.subr.mxu0 0.0
    %761 = vmatpush1.msra.mxu0 0.0
    %762 = vmatprep.subr.mxu0 0.0
    %763 = vmatpush1.msra.mxu0 0.0
    %764 = vmatprep.subr.mxu0 0.0
    %765 = vmatpush1.msra.mxu0 0.0
    %766 = vmatprep.subr.mxu0 0.0
    %767 = vmatpush1.msra.mxu0 0.0
    %768 = vmatprep.subr.mxu0 0.0
    %769 = vmatpush1.msra.mxu0 0.0
    %770 = vmatprep.subr.mxu0 0.0
    %771 = vmatpush1.msra.mxu0 0.0
    %772 = vmatprep.subr.mxu0 0.0
    %773 = vmatpush1.msra.mxu0 0.0
    %774 = vmatprep.subr.mxu0 0.0
    %775 = vmatpush1.msra.mxu0 0.0
    %776 = vmatprep.subr.mxu0 0.0
    %777 = vmatpush1.msra.mxu0 0.0
    %778 = vmatprep.subr.mxu0 0.0
    %779 = vmatpush1.msra.mxu0 0.0
    %780 = vmatprep.mubr.f32.mxu0 0.0
    %781 = vmatmul.mubr.f32.gmra.mrb[0].mxu0 %v143
    %v782 = vpop.f32.mrb[0].mxu0
    %v783 = vadd.f32 0.0, %v782
    %v784 = vpop.f32.mrb[0].mxu0
    %785 = vmatprep.mubr.f32.mxu0 0.0
    %786 = vmatmul.mubr.f32.gmra.mrb[0].mxu0 %v144
    %v787 = vpop.f32.mrb[0].mxu0
    %v788 = vadd.f32 0.0, %v787
    %v789 = vpop.f32.mrb[0].mxu0
    %790 = vmatprep.mubr.f32.mxu0 0.0
    %791 = vmatmul.mubr.f32.gmra.mrb[0].mxu0 %v145
    %v792 = vpop.f32.mrb[0].mxu0
    %v793 = vadd.f32 0.0, %v792
    %v794 = vpop.f32.mrb[0].mxu0
    %795 = vmatprep.mubr.f32.mxu0 0.0
    %796 = vmatmul.mubr.f32.gmra.mrb[0].mxu0 %v146
    %v797 = vpop.f32.mrb[0].mxu0
    %v798 = vadd.f32 0.0, %v797
    %v799 = vpop.f32.mrb[0].mxu0
    %800 = vdwg.mxu0
    %vm801 = vcmask 392192
    %v803 = vsel %vm801, %v132, 0
    %v806 = vsel %vm801, %v133, 0
    %v809 = vsel %vm801, %v134, 0
    %v812 = vsel %vm801, %v135, 0
    %814 = vmatprep.subr.mxu0 0.0
    %815 = vmatpush1.msra.mxu0 %v710
    %816 = vmatprep.subr.mxu0 0.0
    %817 = vmatpush1.msra.mxu0 %v711
    %818 = vmatprep.subr.mxu0 0.0
    %819 = vmatpush1.msra.mxu0 %v712
    %820 = vmatprep.subr.mxu0 0.0
    %821 = vmatpush1.msra.mxu0 %v713
    %822 = vmatprep.subr.mxu0 0.0
    %823 = vmatpush1.msra.mxu0 %v714
    %824 = vmatprep.subr.mxu0 0.0
    %825 = vmatpush1.msra.mxu0 %v715
    %826 = vmatprep.subr.mxu0 0.0
    %827 = vmatpush1.msra.mxu0 0.0
    %828 = vmatprep.subr.mxu0 0.0
    %829 = vmatpush1.msra.mxu0 0.0
    %830 = vmatprep.subr.mxu0 0.0
    %831 = vmatpush1.msra.mxu0 0.0
    %832 = vmatprep.subr.mxu0 0.0
    %833 = vmatpush1.msra.mxu0 0.0
    %834 = vmatprep.subr.mxu0 0.0
    %835 = vmatpush1.msra.mxu0 0.0
    %836 = vmatprep.subr.mxu0 0.0
    %837 = vmatpush1.msra.mxu0 0.0
    %838 = vmatprep.subr.mxu0 0.0
    %839 = vmatpush1.msra.mxu0 0.0
    %840 = vmatprep.subr.mxu0 0.0
    %841 = vmatpush1.msra.mxu0 0.0
    %842 = vmatprep.subr.mxu0 0.0
    %843 = vmatpush1.msra.mxu0 0.0
    %844 = vmatprep.subr.mxu0 0.0
    %845 = vmatpush1.msra.mxu0 0.0
    %846 = vmatprep.subr.mxu0 0.0
    %847 = vmatpush1.msra.mxu0 0.0
    %848 = vmatprep.subr.mxu0 0.0
    %849 = vmatpush1.msra.mxu0 0.0
    %850 = vmatprep.subr.mxu0 0.0
    %851 = vmatpush1.msra.mxu0 0.0
    %852 = vmatprep.subr.mxu0 0.0
    %853 = vmatpush1.msra.mxu0 0.0
    %854 = vmatprep.subr.mxu0 0.0
    %855 = vmatpush1.msra.mxu0 0.0
    %856 = vmatprep.subr.mxu0 0.0
    %857 = vmatpush1.msra.mxu0 0.0
    %858 = vmatprep.subr.mxu0 0.0
    %859 = vmatpush1.msra.mxu0 0.0
    %860 = vmatprep.subr.mxu0 0.0
    %861 = vmatpush1.msra.mxu0 0.0
    %862 = vmatprep.subr.mxu0 0.0
    %863 = vmatpush1.msra.mxu0 0.0
    %864 = vmatprep.subr.mxu0 0.0
    %865 = vmatpush1.msra.mxu0 0.0
    %866 = vmatprep.subr.mxu0 0.0
    %867 = vmatpush1.msra.mxu0 0.0
    %868 = vmatprep.subr.mxu0 0.0
    %869 = vmatpush1.msra.mxu0 0.0
    %870 = vmatprep.subr.mxu0 0.0
    %871 = vmatpush1.msra.mxu0 0.0
    %872 = vmatprep.subr.mxu0 0.0
    %873 = vmatpush1.msra.mxu0 0.0
    %874 = vmatprep.subr.mxu0 0.0
    %875 = vmatpush1.msra.mxu0 0.0
    %876 = vmatprep.subr.mxu0 0.0
    %877 = vmatpush1.msra.mxu0 0.0
    %878 = vmatprep.mubr.f32.mxu0 0.0
    %879 = vmatmul.mubr.f32.gmra.mrb[0].mxu0 %v803
    %v880 = vpop.f32.mrb[0].mxu0
    %v881 = vadd.f32 %v783, %v880
    %v882 = vpop.f32.mrb[0].mxu0
    %883 = vmatprep.mubr.f32.mxu0 0.0
    %884 = vmatmul.mubr.f32.gmra.mrb[0].mxu0 %v806
    %v885 = vpop.f32.mrb[0].mxu0
    %v886 = vadd.f32 %v788, %v885
    %v887 = vpop.f32.mrb[0].mxu0
    %888 = vmatprep.mubr.f32.mxu0 0.0
    %889 = vmatmul.mubr.f32.gmra.mrb[0].mxu0 %v809
    %v890 = vpop.f32.mrb[0].mxu0
    %v891 = vadd.f32 %v793, %v890
    %v892 = vpop.f32.mrb[0].mxu0
    %893 = vmatprep.mubr.f32.mxu0 0.0
    %894 = vmatmul.mubr.f32.gmra.mrb[0].mxu0 %v812
    %v895 = vpop.f32.mrb[0].mxu0
    %v896 = vadd.f32 %v798, %v895
    %v897 = vpop.f32.mrb[0].mxu0
    %898 = vdwg.mxu0
    %v899 = vadd.f32 %v881, 1e-06
    %v900 = vadd.f32 %v886, 1e-06
    %v901 = vadd.f32 %v891, 1e-06
    %v902 = vadd.f32 %v896, 1e-06
    %v903 = vmul.f32 %v542, %v140
    %v904 = vmul.f32 %v543, %v140
    %905 = vadd.xlane.f32.xlu0 %v903
    %v906 = vpop.xlane.xlu0 %905
    %907 = vadd.xlane.f32.xlu0 %v904
    %v908 = vpop.xlane.xlu0 %907
    %v909 = vmul.f32 %v906, 0.03125
    %v910 = vmul.f32 %v908, 0.03125
    %v911 = vsub.f32 %v542, %v909
    %v912 = vsub.f32 %v543, %v910
    %v913 = vmul.f32 %v911, %v140
    %v914 = vmul.f32 %v912, %v140
    %v915 = vmul.f32 %v913, %v913
    %v916 = vmul.f32 %v914, %v914
    %917 = vadd.xlane.f32.xlu0 %v915
    %v918 = vpop.xlane.xlu0 %917
    %919 = vadd.xlane.f32.xlu0 %v916
    %v920 = vpop.xlane.xlu0 %919
    %v921 = vmul.f32 %v918, 0.03125
    %v922 = vmul.f32 %v920, 0.03125
    %v923 = vadd.f32 %v921, 1e-05
    %v924 = vadd.f32 %v922, 1e-05
    %v925 = vrsqrt.pop %v923
    %v926 = vrsqrt.pop %v924
    %v927 = vmul.f32 %v913, %v925
    %v928 = vmul.f32 %v914, %v926
    %v929 = vmul.f32 %v899, %v140
    %v930 = vmul.f32 %v900, %v140
    %v931 = vmul.f32 %v901, %v140
    %v932 = vmul.f32 %v902, %v140
    %933 = vadd.xlane.f32.xlu0 %v929
    %v934 = vpop.xlane.xlu0 %933
    %935 = vadd.xlane.f32.xlu0 %v930
    %v936 = vpop.xlane.xlu0 %935
    %937 = vadd.xlane.f32.xlu0 %v931
    %v938 = vpop.xlane.xlu0 %937
    %939 = vadd.xlane.f32.xlu0 %v932
    %v940 = vpop.xlane.xlu0 %939
    %v941 = vmul.f32 %v934, 0.03125
    %v942 = vmul.f32 %v936, 0.03125
    %v943 = vmul.f32 %v938, 0.03125
    %v944 = vmul.f32 %v940, 0.03125
    %v945 = vsub.f32 %v899, %v941
    %v946 = vsub.f32 %v900, %v942
    %v947 = vsub.f32 %v901, %v943
    %v948 = vsub.f32 %v902, %v944
    %v949 = vmul.f32 %v945, %v140
    %v950 = vmul.f32 %v946, %v140
    %v951 = vmul.f32 %v947, %v140
    %v952 = vmul.f32 %v948, %v140
    %v953 = vmul.f32 %v949, %v949
    %v954 = vmul.f32 %v950, %v950
    %v955 = vmul.f32 %v951, %v951
    %v956 = vmul.f32 %v952, %v952
    %957 = vadd.xlane.f32.xlu0 %v953
    %v958 = vpop.xlane.xlu0 %957
    %959 = vadd.xlane.f32.xlu0 %v954
    %v960 = vpop.xlane.xlu0 %959
    %961 = vadd.xlane.f32.xlu0 %v955
    %v962 = vpop.xlane.xlu0 %961
    %963 = vadd.xlane.f32.xlu0 %v956
    %v964 = vpop.xlane.xlu0 %963
    %v965 = vmul.f32 %v958, 0.03125
    %v966 = vmul.f32 %v960, 0.03125
    %v967 = vmul.f32 %v962, 0.03125
    %v968 = vmul.f32 %v964, 0.03125
    %v969 = vadd.f32 %v965, 1e-05
    %v970 = vadd.f32 %v966, 1e-05
    %v971 = vadd.f32 %v967, 1e-05
    %v972 = vadd.f32 %v968, 1e-05
    %v973 = vrsqrt.pop %v969
    %v974 = vrsqrt.pop %v970
    %v975 = vrsqrt.pop %v971
    %v976 = vrsqrt.pop %v972
    %v977 = vmul.f32 %v949, %v973
    %v978 = vmul.f32 %v950, %v974
    %v979 = vmul.f32 %v951, %v975
    %v980 = vmul.f32 %v952, %v976
    %v981 = vld [vmem:[#allocation7] sm:$0xff]
    %v982 = vld [vmem:[#allocation7 + $0x8] sm:$0xff]
    %v983 = vld [vmem:[#allocation7 + $0x10] sm:$0xff]
    %v984 = vld [vmem:[#allocation7 + $0x18] sm:$0xff]
    %v985 = vld [vmem:[#allocation7 + $0x20] sm:$0xff]
    %v986 = vld [vmem:[#allocation7 + $0x28] sm:$0xff]
    %v987 = vld [vmem:[#allocation7 + $0x30] sm:$0xff]
    %v988 = vld [vmem:[#allocation7 + $0x38] sm:$0xff]
    %v989 = vld [vmem:[#allocation7 + $0x40] sm:$0xff]
    %v990 = vld [vmem:[#allocation7 + $0x48] sm:$0xff]
    %v991 = vld [vmem:[#allocation7 + $0x50] sm:$0xff]
    %v992 = vld [vmem:[#allocation7 + $0x58] sm:$0xff]
    %v993 = vld [vmem:[#allocation7 + $0x60] sm:$0xff]
    %v994 = vld [vmem:[#allocation7 + $0x68] sm:$0xff]
    %v995 = vld [vmem:[#allocation7 + $0x70] sm:$0xff]
    %v996 = vld [vmem:[#allocation7 + $0x78] sm:$0xff]
    %v997 = vld [vmem:[#allocation9] sm:$0xff]
    %v998 = vld [vmem:[#allocation9 + $0x8] sm:$0xff]
    %v999 = vld [vmem:[#allocation9 + $0x10] sm:$0xff]
    %v1000 = vld [vmem:[#allocation9 + $0x18] sm:$0xff]
    %v1001 = vld [vmem:[#allocation9 + $0x20] sm:$0xff]
    %v1002 = vld [vmem:[#allocation9 + $0x28] sm:$0xff]
    %v1003 = vld [vmem:[#allocation9 + $0x30] sm:$0xff]
    %v1004 = vld [vmem:[#allocation9 + $0x38] sm:$0xff]
    %v1005 = vld [vmem:[#allocation9 + $0x40] sm:$0xff]
    %v1006 = vld [vmem:[#allocation9 + $0x48] sm:$0xff]
    %v1007 = vld [vmem:[#allocation9 + $0x50] sm:$0xff]
    %v1008 = vld [vmem:[#allocation9 + $0x58] sm:$0xff]
    %v1009 = vld [vmem:[#allocation9 + $0x60] sm:$0xff]
    %v1010 = vld [vmem:[#allocation9 + $0x68] sm:$0xff]
    %v1011 = vld [vmem:[#allocation9 + $0x70] sm:$0xff]
    %v1012 = vld [vmem:[#allocation9 + $0x78] sm:$0xff]
    %v1013 = vld [vmem:[#allocation10] sm:$0xff]
    %v1014 = vld [vmem:[#allocation10 + $0x8] sm:$0xff]
    %v1015 = vld [vmem:[#allocation10 + $0x10] sm:$0xff]
    %v1016 = vld [vmem:[#allocation10 + $0x18] sm:$0xff]
    %v1017 = vld [vmem:[#allocation10 + $0x20] sm:$0xff]
    %v1018 = vld [vmem:[#allocation10 + $0x28] sm:$0xff]
    %v1019 = vld [vmem:[#allocation10 + $0x30] sm:$0xff]
    %v1020 = vld [vmem:[#allocation10 + $0x38] sm:$0xff]
    %v1021 = vld [vmem:[#allocation10 + $0x40] sm:$0xff]
    %v1022 = vld [vmem:[#allocation10 + $0x48] sm:$0xff]
    %v1023 = vld [vmem:[#allocation10 + $0x50] sm:$0xff]
    %v1024 = vld [vmem:[#allocation10 + $0x58] sm:$0xff]
    %v1025 = vld [vmem:[#allocation10 + $0x60] sm:$0xff]
    %v1026 = vld [vmem:[#allocation10 + $0x68] sm:$0xff]
    %v1027 = vld [vmem:[#allocation10 + $0x70] sm:$0xff]
    %v1028 = vld [vmem:[#allocation10 + $0x78] sm:$0xff]
    %v1029 = vld [vmem:[#allocation12] sm:$0xff]
    %v1030 = vld [vmem:[#allocation12 + $0x8] sm:$0xff]
    %v1031 = vld [vmem:[#allocation12 + $0x10] sm:$0xff]
    %v1032 = vld [vmem:[#allocation12 + $0x18] sm:$0xff]
    %v1033 = vld [vmem:[#allocation12 + $0x20] sm:$0xff]
    %v1034 = vld [vmem:[#allocation12 + $0x28] sm:$0xff]
    %v1035 = vld [vmem:[#allocation12 + $0x30] sm:$0xff]
    %v1036 = vld [vmem:[#allocation12 + $0x38] sm:$0xff]
    %v1037 = vld [vmem:[#allocation12 + $0x40] sm:$0xff]
    %v1038 = vld [vmem:[#allocation12 + $0x48] sm:$0xff]
    %v1039 = vld [vmem:[#allocation12 + $0x50] sm:$0xff]
    %v1040 = vld [vmem:[#allocation12 + $0x58] sm:$0xff]
    %v1041 = vld [vmem:[#allocation12 + $0x60] sm:$0xff]
    %v1042 = vld [vmem:[#allocation12 + $0x68] sm:$0xff]
    %v1043 = vld [vmem:[#allocation12 + $0x70] sm:$0xff]
    %v1044 = vld [vmem:[#allocation12 + $0x78] sm:$0xff]
    %v1045 = vld [vmem:[#allocation13] sm:$0xff]
    %v1046 = vld [vmem:[#allocation13 + $0x8] sm:$0xff]
    %v1047 = vld [vmem:[#allocation13 + $0x10] sm:$0xff]
    %v1048 = vld [vmem:[#allocation13 + $0x18] sm:$0xff]
    %v1049 = vld [vmem:[#allocation13 + $0x20] sm:$0xff]
    %v1050 = vld [vmem:[#allocation13 + $0x28] sm:$0xff]
    %v1051 = vld [vmem:[#allocation13 + $0x30] sm:$0xff]
    %v1052 = vld [vmem:[#allocation13 + $0x38] sm:$0xff]
    %v1053 = vld [vmem:[#allocation13 + $0x40] sm:$0xff]
    %v1054 = vld [vmem:[#allocation13 + $0x48] sm:$0xff]
    %v1055 = vld [vmem:[#allocation13 + $0x50] sm:$0xff]
    %v1056 = vld [vmem:[#allocation13 + $0x58] sm:$0xff]
    %v1057 = vld [vmem:[#allocation13 + $0x60] sm:$0xff]
    %v1058 = vld [vmem:[#allocation13 + $0x68] sm:$0xff]
    %v1059 = vld [vmem:[#allocation13 + $0x70] sm:$0xff]
    %v1060 = vld [vmem:[#allocation13 + $0x78] sm:$0xff]
    %1061 = vmatprep.subr.mxu0 0.0
    %1062 = vmatpush1.msra.mxu0 %v981
    %1063 = vmatprep.subr.mxu0 0.0
    %1064 = vmatpush1.msra.mxu0 %v982
    %1065 = vmatprep.subr.mxu0 0.0
    %1066 = vmatpush1.msra.mxu0 %v983
    %1067 = vmatprep.subr.mxu0 0.0
    %1068 = vmatpush1.msra.mxu0 %v984
    %1069 = vmatprep.subr.mxu0 0.0
    %1070 = vmatpush1.msra.mxu0 %v985
    %1071 = vmatprep.subr.mxu0 0.0
    %1072 = vmatpush1.msra.mxu0 %v986
    %1073 = vmatprep.subr.mxu0 0.0
    %1074 = vmatpush1.msra.mxu0 %v987
    %1075 = vmatprep.subr.mxu0 0.0
    %1076 = vmatpush1.msra.mxu0 %v988
    %1077 = vmatprep.subr.mxu0 0.0
    %1078 = vmatpush1.msra.mxu0 %v989
    %1079 = vmatprep.subr.mxu0 0.0
    %1080 = vmatpush1.msra.mxu0 %v990
    %1081 = vmatprep.subr.mxu0 0.0
    %1082 = vmatpush1.msra.mxu0 %v991
    %1083 = vmatprep.subr.mxu0 0.0
    %1084 = vmatpush1.msra.mxu0 %v992
    %1085 = vmatprep.subr.mxu0 0.0
    %1086 = vmatpush1.msra.mxu0 %v993
    %1087 = vmatprep.subr.mxu0 0.0
    %1088 = vmatpush1.msra.mxu0 %v994
    %1089 = vmatprep.subr.mxu0 0.0
    %1090 = vmatpush1.msra.mxu0 %v995
    %1091 = vmatprep.subr.mxu0 0.0
    %1092 = vmatpush1.msra.mxu0 %v996
    %1093 = vmatprep.subr.mxu0 0.0
    %1094 = vmatpush1.msra.mxu0 0.0
    %1095 = vmatprep.subr.mxu0 0.0
    %1096 = vmatpush1.msra.mxu0 0.0
    %1097 = vmatprep.subr.mxu0 0.0
    %1098 = vmatpush1.msra.mxu0 0.0
    %1099 = vmatprep.subr.mxu0 0.0
    %1100 = vmatpush1.msra.mxu0 0.0
    %1101 = vmatprep.subr.mxu0 0.0
    %1102 = vmatpush1.msra.mxu0 0.0
    %1103 = vmatprep.subr.mxu0 0.0
    %1104 = vmatpush1.msra.mxu0 0.0
    %1105 = vmatprep.subr.mxu0 0.0
    %1106 = vmatpush1.msra.mxu0 0.0
    %1107 = vmatprep.subr.mxu0 0.0
    %1108 = vmatpush1.msra.mxu0 0.0
    %1109 = vmatprep.subr.mxu0 0.0
    %1110 = vmatpush1.msra.mxu0 0.0
    %1111 = vmatprep.subr.mxu0 0.0
    %1112 = vmatpush1.msra.mxu0 0.0
    %1113 = vmatprep.subr.mxu0 0.0
    %1114 = vmatpush1.msra.mxu0 0.0
    %1115 = vmatprep.subr.mxu0 0.0
    %1116 = vmatpush1.msra.mxu0 0.0
    %1117 = vmatprep.subr.mxu0 0.0
    %1118 = vmatpush1.msra.mxu0 0.0
    %1119 = vmatprep.subr.mxu0 0.0
    %1120 = vmatpush1.msra.mxu0 0.0
    %1121 = vmatprep.subr.mxu0 0.0
    %1122 = vmatpush1.msra.mxu0 0.0
    %1123 = vmatprep.subr.mxu0 0.0
    %1124 = vmatpush1.msra.mxu0 0.0
    %1125 = vmatprep.mubr.f32.mxu0 0.0
    %1126 = vmatmul.mubr.f32.gmra.mrb[0].mxu0 %v927
    %v1127 = vpop.f32.mrb[0].mxu0
    %v1128 = vadd.f32 0.0, %v1127
    %v1129 = vpop.f32.mrb[0].mxu0
    %1130 = vmatprep.mubr.f32.mxu0 0.0
    %1131 = vmatmul.mubr.f32.gmra.mrb[0].mxu0 %v928
    %v1132 = vpop.f32.mrb[0].mxu0
    %v1133 = vadd.f32 0.0, %v1132
    %v1134 = vpop.f32.mrb[0].mxu0
    %1135 = vdwg.mxu0
    %1136 = vst [vmem:[#allocation2] sm:$0xff] %v1128
    %1137 = vst [vmem:[#allocation2 + $0x8] sm:$0xff] %v1133
    %1138 = vmatprep.subr.mxu0 0.0
    %1139 = vmatpush1.msra.mxu0 %v997
    %1140 = vmatprep.subr.mxu0 0.0
    %1141 = vmatpush1.msra.mxu0 %v998
    %1142 = vmatprep.subr.mxu0 0.0
    %1143 = vmatpush1.msra.mxu0 %v999
    %1144 = vmatprep.subr.mxu0 0.0
    %1145 = vmatpush1.msra.mxu0 %v1000
    %1146 = vmatprep.subr.mxu0 0.0
    %1147 = vmatpush1.msra.mxu0 %v1001
    %1148 = vmatprep.subr.mxu0 0.0
    %1149 = vmatpush1.msra.mxu0 %v1002
    %1150 = vmatprep.subr.mxu0 0.0
    %1151 = vmatpush1.msra.mxu0 %v1003
    %1152 = vmatprep.subr.mxu0 0.0
    %1153 = vmatpush1.msra.mxu0 %v1004
    %1154 = vmatprep.subr.mxu0 0.0
    %1155 = vmatpush1.msra.mxu0 %v1005
    %1156 = vmatprep.subr.mxu0 0.0
    %1157 = vmatpush1.msra.mxu0 %v1006
    %1158 = vmatprep.subr.mxu0 0.0
    %1159 = vmatpush1.msra.mxu0 %v1007
    %1160 = vmatprep.subr.mxu0 0.0
    %1161 = vmatpush1.msra.mxu0 %v1008
    %1162 = vmatprep.subr.mxu0 0.0
    %1163 = vmatpush1.msra.mxu0 %v1009
    %1164 = vmatprep.subr.mxu0 0.0
    %1165 = vmatpush1.msra.mxu0 %v1010
    %1166 = vmatprep.subr.mxu0 0.0
    %1167 = vmatpush1.msra.mxu0 %v1011
    %1168 = vmatprep.subr.mxu0 0.0
    %1169 = vmatpush1.msra.mxu0 %v1012
    %1170 = vmatprep.subr.mxu0 0.0
    %1171 = vmatpush1.msra.mxu0 0.0
    %1172 = vmatprep.subr.mxu0 0.0
    %1173 = vmatpush1.msra.mxu0 0.0
    %1174 = vmatprep.subr.mxu0 0.0
    %1175 = vmatpush1.msra.mxu0 0.0
    %1176 = vmatprep.subr.mxu0 0.0
    %1177 = vmatpush1.msra.mxu0 0.0
    %1178 = vmatprep.subr.mxu0 0.0
    %1179 = vmatpush1.msra.mxu0 0.0
    %1180 = vmatprep.subr.mxu0 0.0
    %1181 = vmatpush1.msra.mxu0 0.0
    %1182 = vmatprep.subr.mxu0 0.0
    %1183 = vmatpush1.msra.mxu0 0.0
    %1184 = vmatprep.subr.mxu0 0.0
    %1185 = vmatpush1.msra.mxu0 0.0
    %1186 = vmatprep.subr.mxu0 0.0
    %1187 = vmatpush1.msra.mxu0 0.0
    %1188 = vmatprep.subr.mxu0 0.0
    %1189 = vmatpush1.msra.mxu0 0.0
    %1190 = vmatprep.subr.mxu0 0.0
    %1191 = vmatpush1.msra.mxu0 0.0
    %1192 = vmatprep.subr.mxu0 0.0
    %1193 = vmatpush1.msra.mxu0 0.0
    %1194 = vmatprep.subr.mxu0 0.0
    %1195 = vmatpush1.msra.mxu0 0.0
    %1196 = vmatprep.subr.mxu0 0.0
    %1197 = vmatpush1.msra.mxu0 0.0
    %1198 = vmatprep.subr.mxu0 0.0
    %1199 = vmatpush1.msra.mxu0 0.0
    %1200 = vmatprep.subr.mxu0 0.0
    %1201 = vmatpush1.msra.mxu0 0.0
    %1202 = vmatprep.mubr.f32.mxu0 0.0
    %1203 = vmatmul.mubr.f32.gmra.mrb[0].mxu0 %v977
    %v1204 = vpop.f32.mrb[0].mxu0
    %v1205 = vadd.f32 0.0, %v1204
    %v1206 = vpop.f32.mrb[0].mxu0
    %1207 = vmatprep.mubr.f32.mxu0 0.0
    %1208 = vmatmul.mubr.f32.gmra.mrb[0].mxu0 %v978
    %v1209 = vpop.f32.mrb[0].mxu0
    %v1210 = vadd.f32 0.0, %v1209
    %v1211 = vpop.f32.mrb[0].mxu0
    %1212 = vdwg.mxu0
    %1213 = vst [vmem:[#allocation2 + $0x10] sm:$0xff] %v1205
    %1214 = vst [vmem:[#allocation2 + $0x18] sm:$0xff] %v1210
    %v1215 = vld [vmem:[#allocation2] sm:$0xff]
    %v1216 = vld [vmem:[#allocation2 + $0x8] sm:$0xff]
    %v1217 = vld [vmem:[#allocation2 + $0x10] sm:$0xff]
    %v1218 = vld [vmem:[#allocation2 + $0x18] sm:$0xff]
    %1219 = vmatprep.subr.mxu0 0.0
    %1220 = vmatpush1.msra.mxu0 %v1045
    %1221 = vmatprep.subr.mxu0 0.0
    %1222 = vmatpush1.msra.mxu0 %v1046
    %1223 = vmatprep.subr.mxu0 0.0
    %1224 = vmatpush1.msra.mxu0 %v1047
    %1225 = vmatprep.subr.mxu0 0.0
    %1226 = vmatpush1.msra.mxu0 %v1048
    %1227 = vmatprep.subr.mxu0 0.0
    %1228 = vmatpush1.msra.mxu0 %v1049
    %1229 = vmatprep.subr.mxu0 0.0
    %1230 = vmatpush1.msra.mxu0 %v1050
    %1231 = vmatprep.subr.mxu0 0.0
    %1232 = vmatpush1.msra.mxu0 %v1051
    %1233 = vmatprep.subr.mxu0 0.0
    %1234 = vmatpush1.msra.mxu0 %v1052
    %1235 = vmatprep.subr.mxu0 0.0
    %1236 = vmatpush1.msra.mxu0 %v1053
    %1237 = vmatprep.subr.mxu0 0.0
    %1238 = vmatpush1.msra.mxu0 %v1054
    %1239 = vmatprep.subr.mxu0 0.0
    %1240 = vmatpush1.msra.mxu0 %v1055
    %1241 = vmatprep.subr.mxu0 0.0
    %1242 = vmatpush1.msra.mxu0 %v1056
    %1243 = vmatprep.subr.mxu0 0.0
    %1244 = vmatpush1.msra.mxu0 %v1057
    %1245 = vmatprep.subr.mxu0 0.0
    %1246 = vmatpush1.msra.mxu0 %v1058
    %1247 = vmatprep.subr.mxu0 0.0
    %1248 = vmatpush1.msra.mxu0 %v1059
    %1249 = vmatprep.subr.mxu0 0.0
    %1250 = vmatpush1.msra.mxu0 %v1060
    %1251 = vmatprep.subr.mxu0 0.0
    %1252 = vmatpush1.msra.mxu0 0.0
    %1253 = vmatprep.subr.mxu0 0.0
    %1254 = vmatpush1.msra.mxu0 0.0
    %1255 = vmatprep.subr.mxu0 0.0
    %1256 = vmatpush1.msra.mxu0 0.0
    %1257 = vmatprep.subr.mxu0 0.0
    %1258 = vmatpush1.msra.mxu0 0.0
    %1259 = vmatprep.subr.mxu0 0.0
    %1260 = vmatpush1.msra.mxu0 0.0
    %1261 = vmatprep.subr.mxu0 0.0
    %1262 = vmatpush1.msra.mxu0 0.0
    %1263 = vmatprep.subr.mxu0 0.0
    %1264 = vmatpush1.msra.mxu0 0.0
    %1265 = vmatprep.subr.mxu0 0.0
    %1266 = vmatpush1.msra.mxu0 0.0
    %1267 = vmatprep.subr.mxu0 0.0
    %1268 = vmatpush1.msra.mxu0 0.0
    %1269 = vmatprep.subr.mxu0 0.0
    %1270 = vmatpush1.msra.mxu0 0.0
    %1271 = vmatprep.subr.mxu0 0.0
    %1272 = vmatpush1.msra.mxu0 0.0
    %1273 = vmatprep.subr.mxu0 0.0
    %1274 = vmatpush1.msra.mxu0 0.0
    %1275 = vmatprep.subr.mxu0 0.0
    %1276 = vmatpush1.msra.mxu0 0.0
    %1277 = vmatprep.subr.mxu0 0.0
    %1278 = vmatpush1.msra.mxu0 0.0
    %1279 = vmatprep.subr.mxu0 0.0
    %1280 = vmatpush1.msra.mxu0 0.0
    %1281 = vmatprep.subr.mxu0 0.0
    %1282 = vmatpush1.msra.mxu0 0.0
    %1283 = vmatprep.mubr.f32.mxu0 0.0
    %1284 = vmatmul.mubr.f32.gmra.mrb[0].mxu0 %v927
    %v1285 = vpop.f32.mrb[0].mxu0
    %v1286 = vadd.f32 0.0, %v1285
    %v1287 = vpop.f32.mrb[0].mxu0
    %1288 = vmatprep.mubr.f32.mxu0 0.0
    %1289 = vmatmul.mubr.f32.gmra.mrb[0].mxu0 %v928
    %v1290 = vpop.f32.mrb[0].mxu0
    %v1291 = vadd.f32 0.0, %v1290
    %v1292 = vpop.f32.mrb[0].mxu0
    %1293 = vdwg.mxu0
    %1294 = vmatprep.subr.mxu0 0.0
    %1295 = vmatpush1.msra.mxu0 %v1215
    %1296 = vmatprep.subr.mxu0 0.0
    %1297 = vmatpush1.msra.mxu0 %v1216
    %1298 = vmatprep.subr.mxu0 0.0
    %1299 = vmatpush1.msra.mxu0 %v1217
    %1300 = vmatprep.subr.mxu0 0.0
    %1301 = vmatpush1.msra.mxu0 %v1218
    %1302 = vmatprep.subr.mxu0 0.0
    %1303 = vmatpush1.msra.mxu0 0.0
    %1304 = vmatprep.subr.mxu0 0.0
    %1305 = vmatpush1.msra.mxu0 0.0
    %1306 = vmatprep.subr.mxu0 0.0
    %1307 = vmatpush1.msra.mxu0 0.0
    %1308 = vmatprep.subr.mxu0 0.0
    %1309 = vmatpush1.msra.mxu0 0.0
    %1310 = vmatprep.subr.mxu0 0.0
    %1311 = vmatpush1.msra.mxu0 0.0
    %1312 = vmatprep.subr.mxu0 0.0
    %1313 = vmatpush1.msra.mxu0 0.0
    %1314 = vmatprep.subr.mxu0 0.0
    %1315 = vmatpush1.msra.mxu0 0.0
    %1316 = vmatprep.subr.mxu0 0.0
    %1317 = vmatpush1.msra.mxu0 0.0
    %1318 = vmatprep.subr.mxu0 0.0
    %1319 = vmatpush1.msra.mxu0 0.0
    %1320 = vmatprep.subr.mxu0 0.0
    %1321 = vmatpush1.msra.mxu0 0.0
    %1322 = vmatprep.subr.mxu0 0.0
    %1323 = vmatpush1.msra.mxu0 0.0
    %1324 = vmatprep.subr.mxu0 0.0
    %1325 = vmatpush1.msra.mxu0 0.0
    %1326 = vmatprep.subr.mxu0 0.0
    %1327 = vmatpush1.msra.mxu0 0.0
    %1328 = vmatprep.subr.mxu0 0.0
    %1329 = vmatpush1.msra.mxu0 0.0
    %1330 = vmatprep.subr.mxu0 0.0
    %1331 = vmatpush1.msra.mxu0 0.0
    %1332 = vmatprep.subr.mxu0 0.0
    %1333 = vmatpush1.msra.mxu0 0.0
    %1334 = vmatprep.subr.mxu0 0.0
    %1335 = vmatpush1.msra.mxu0 0.0
    %1336 = vmatprep.subr.mxu0 0.0
    %1337 = vmatpush1.msra.mxu0 0.0
    %1338 = vmatprep.subr.mxu0 0.0
    %1339 = vmatpush1.msra.mxu0 0.0
    %1340 = vmatprep.subr.mxu0 0.0
    %1341 = vmatpush1.msra.mxu0 0.0
    %1342 = vmatprep.subr.mxu0 0.0
    %1343 = vmatpush1.msra.mxu0 0.0
    %1344 = vmatprep.subr.mxu0 0.0
    %1345 = vmatpush1.msra.mxu0 0.0
    %1346 = vmatprep.subr.mxu0 0.0
    %1347 = vmatpush1.msra.mxu0 0.0
    %1348 = vmatprep.subr.mxu0 0.0
    %1349 = vmatpush1.msra.mxu0 0.0
    %1350 = vmatprep.subr.mxu0 0.0
    %1351 = vmatpush1.msra.mxu0 0.0
    %1352 = vmatprep.subr.mxu0 0.0
    %1353 = vmatpush1.msra.mxu0 0.0
    %1354 = vmatprep.subr.mxu0 0.0
    %1355 = vmatpush1.msra.mxu0 0.0
    %1356 = vmatprep.subr.mxu0 0.0
    %1357 = vmatpush1.msra.mxu0 0.0
    %1358 = vmatprep.mubr.f32.mxu0 0.0
    %1359 = vmatmul.mubr.f32.gmra.mrb[0].mxu0 %v462
    %v1360 = vpop.f32.mrb[0].mxu0
    %v1361 = vadd.f32 %v1286, %v1360
    %v1362 = vpop.f32.mrb[0].mxu0
    %1363 = vmatprep.mubr.f32.mxu0 0.0
    %1364 = vmatmul.mubr.f32.gmra.mrb[0].mxu0 %v465
    %v1365 = vpop.f32.mrb[0].mxu0
    %v1366 = vadd.f32 %v1291, %v1365
    %v1367 = vpop.f32.mrb[0].mxu0
    %1368 = vdwg.mxu0
    %v1369 = vadd.f32 %v1361, 1e-06
    %v1370 = vadd.f32 %v1366, 1e-06
    %1371 = vmatprep.subr.mxu0 0.0
    %1372 = vmatpush1.msra.mxu0 %v1029
    %1373 = vmatprep.subr.mxu0 0.0
    %1374 = vmatpush1.msra.mxu0 %v1030
    %1375 = vmatprep.subr.mxu0 0.0
    %1376 = vmatpush1.msra.mxu0 %v1031
    %1377 = vmatprep.subr.mxu0 0.0
    %1378 = vmatpush1.msra.mxu0 %v1032
    %1379 = vmatprep.subr.mxu0 0.0
    %1380 = vmatpush1.msra.mxu0 %v1033
    %1381 = vmatprep.subr.mxu0 0.0
    %1382 = vmatpush1.msra.mxu0 %v1034
    %1383 = vmatprep.subr.mxu0 0.0
    %1384 = vmatpush1.msra.mxu0 %v1035
    %1385 = vmatprep.subr.mxu0 0.0
    %1386 = vmatpush1.msra.mxu0 %v1036
    %1387 = vmatprep.subr.mxu0 0.0
    %1388 = vmatpush1.msra.mxu0 %v1037
    %1389 = vmatprep.subr.mxu0 0.0
    %1390 = vmatpush1.msra.mxu0 %v1038
    %1391 = vmatprep.subr.mxu0 0.0
    %1392 = vmatpush1.msra.mxu0 %v1039
    %1393 = vmatprep.subr.mxu0 0.0
    %1394 = vmatpush1.msra.mxu0 %v1040
    %1395 = vmatprep.subr.mxu0 0.0
    %1396 = vmatpush1.msra.mxu0 %v1041
    %1397 = vmatprep.subr.mxu0 0.0
    %1398 = vmatpush1.msra.mxu0 %v1042
    %1399 = vmatprep.subr.mxu0 0.0
    %1400 = vmatpush1.msra.mxu0 %v1043
    %1401 = vmatprep.subr.mxu0 0.0
    %1402 = vmatpush1.msra.mxu0 %v1044
    %1403 = vmatprep.subr.mxu0 0.0
    %1404 = vmatpush1.msra.mxu0 0.0
    %1405 = vmatprep.subr.mxu0 0.0
    %1406 = vmatpush1.msra.mxu0 0.0
    %1407 = vmatprep.subr.mxu0 0.0
    %1408 = vmatpush1.msra.mxu0 0.0
    %1409 = vmatprep.subr.mxu0 0.0
    %1410 = vmatpush1.msra.mxu0 0.0
    %1411 = vmatprep.subr.mxu0 0.0
    %1412 = vmatpush1.msra.mxu0 0.0
    %1413 = vmatprep.subr.mxu0 0.0
    %1414 = vmatpush1.msra.mxu0 0.0
    %1415 = vmatprep.subr.mxu0 0.0
    %1416 = vmatpush1.msra.mxu0 0.0
    %1417 = vmatprep.subr.mxu0 0.0
    %1418 = vmatpush1.msra.mxu0 0.0
    %1419 = vmatprep.subr.mxu0 0.0
    %1420 = vmatpush1.msra.mxu0 0.0
    %1421 = vmatprep.subr.mxu0 0.0
    %1422 = vmatpush1.msra.mxu0 0.0
    %1423 = vmatprep.subr.mxu0 0.0
    %1424 = vmatpush1.msra.mxu0 0.0
    %1425 = vmatprep.subr.mxu0 0.0
    %1426 = vmatpush1.msra.mxu0 0.0
    %1427 = vmatprep.subr.mxu0 0.0
    %1428 = vmatpush1.msra.mxu0 0.0
    %1429 = vmatprep.subr.mxu0 0.0
    %1430 = vmatpush1.msra.mxu0 0.0
    %1431 = vmatprep.subr.mxu0 0.0
    %1432 = vmatpush1.msra.mxu0 0.0
    %1433 = vmatprep.subr.mxu0 0.0
    %1434 = vmatpush1.msra.mxu0 0.0
    %1435 = vmatprep.mubr.f32.mxu0 0.0
    %1436 = vmatmul.mubr.f32.gmra.mrb[0].mxu0 %v977
    %v1437 = vpop.f32.mrb[0].mxu0
    %v1438 = vadd.f32 0.0, %v1437
    %v1439 = vpop.f32.mrb[0].mxu0
    %1440 = vmatprep.mubr.f32.mxu0 0.0
    %1441 = vmatmul.mubr.f32.gmra.mrb[0].mxu0 %v978
    %v1442 = vpop.f32.mrb[0].mxu0
    %v1443 = vadd.f32 0.0, %v1442
    %v1444 = vpop.f32.mrb[0].mxu0
    %1445 = vmatprep.mubr.f32.mxu0 0.0
    %1446 = vmatmul.mubr.f32.gmra.mrb[0].mxu0 %v979
    %v1447 = vpop.f32.mrb[0].mxu0
    %v1448 = vadd.f32 0.0, %v1447
    %v1449 = vpop.f32.mrb[0].mxu0
    %1450 = vmatprep.mubr.f32.mxu0 0.0
    %1451 = vmatmul.mubr.f32.gmra.mrb[0].mxu0 %v980
    %v1452 = vpop.f32.mrb[0].mxu0
    %v1453 = vadd.f32 0.0, %v1452
    %v1454 = vpop.f32.mrb[0].mxu0
    %1455 = vdwg.mxu0
    %1456 = vst [vmem:[#allocation3] sm:$0xff] %v1438
    %1457 = vst [vmem:[#allocation3 + $0x8] sm:$0xff] %v1443
    %1458 = vst [vmem:[#allocation3 + $0x10] sm:$0xff] %v1448
    %1459 = vst [vmem:[#allocation3 + $0x18] sm:$0xff] %v1453
    %1460 = vmatprep.subr.mxu0 0.0
    %1461 = vmatpush1.msra.mxu0 %v1013
    %1462 = vmatprep.subr.mxu0 0.0
    %1463 = vmatpush1.msra.mxu0 %v1014
    %1464 = vmatprep.subr.mxu0 0.0
    %1465 = vmatpush1.msra.mxu0 %v1015
    %1466 = vmatprep.subr.mxu0 0.0
    %1467 = vmatpush1.msra.mxu0 %v1016
    %1468 = vmatprep.subr.mxu0 0.0
    %1469 = vmatpush1.msra.mxu0 %v1017
    %1470 = vmatprep.subr.mxu0 0.0
    %1471 = vmatpush1.msra.mxu0 %v1018
    %1472 = vmatprep.subr.mxu0 0.0
    %1473 = vmatpush1.msra.mxu0 %v1019
    %1474 = vmatprep.subr.mxu0 0.0
    %1475 = vmatpush1.msra.mxu0 %v1020
    %1476 = vmatprep.subr.mxu0 0.0
    %1477 = vmatpush1.msra.mxu0 %v1021
    %1478 = vmatprep.subr.mxu0 0.0
    %1479 = vmatpush1.msra.mxu0 %v1022
    %1480 = vmatprep.subr.mxu0 0.0
    %1481 = vmatpush1.msra.mxu0 %v1023
    %1482 = vmatprep.subr.mxu0 0.0
    %1483 = vmatpush1.msra.mxu0 %v1024
    %1484 = vmatprep.subr.mxu0 0.0
    %1485 = vmatpush1.msra.mxu0 %v1025
    %1486 = vmatprep.subr.mxu0 0.0
    %1487 = vmatpush1.msra.mxu0 %v1026
    %1488 = vmatprep.subr.mxu0 0.0
    %1489 = vmatpush1.msra.mxu0 %v1027
    %1490 = vmatprep.subr.mxu0 0.0
    %1491 = vmatpush1.msra.mxu0 %v1028
    %1492 = vmatprep.subr.mxu0 0.0
    %1493 = vmatpush1.msra.mxu0 0.0
    %1494 = vmatprep.subr.mxu0 0.0
    %1495 = vmatpush1.msra.mxu0 0.0
    %1496 = vmatprep.subr.mxu0 0.0
    %1497 = vmatpush1.msra.mxu0 0.0
    %1498 = vmatprep.subr.mxu0 0.0
    %1499 = vmatpush1.msra.mxu0 0.0
    %1500 = vmatprep.subr.mxu0 0.0
    %1501 = vmatpush1.msra.mxu0 0.0
    %1502 = vmatprep.subr.mxu0 0.0
    %1503 = vmatpush1.msra.mxu0 0.0
    %1504 = vmatprep.subr.mxu0 0.0
    %1505 = vmatpush1.msra.mxu0 0.0
    %1506 = vmatprep.subr.mxu0 0.0
    %1507 = vmatpush1.msra.mxu0 0.0
    %1508 = vmatprep.subr.mxu0 0.0
    %1509 = vmatpush1.msra.mxu0 0.0
    %1510 = vmatprep.subr.mxu0 0.0
    %1511 = vmatpush1.msra.mxu0 0.0
    %1512 = vmatprep.subr.mxu0 0.0
    %1513 = vmatpush1.msra.mxu0 0.0
    %1514 = vmatprep.subr.mxu0 0.0
    %1515 = vmatpush1.msra.mxu0 0.0
    %1516 = vmatprep.subr.mxu0 0.0
    %1517 = vmatpush1.msra.mxu0 0.0
    %1518 = vmatprep.subr.mxu0 0.0
    %1519 = vmatpush1.msra.mxu0 0.0
    %1520 = vmatprep.subr.mxu0 0.0
    %1521 = vmatpush1.msra.mxu0 0.0
    %1522 = vmatprep.subr.mxu0 0.0
    %1523 = vmatpush1.msra.mxu0 0.0
    %1524 = vmatprep.mubr.f32.mxu0 0.0
    %1525 = vmatmul.mubr.f32.gmra.mrb[0].mxu0 %v927
    %v1526 = vpop.f32.mrb[0].mxu0
    %v1527 = vadd.f32 0.0, %v1526
    %v1528 = vpop.f32.mrb[0].mxu0
    %1529 = vmatprep.mubr.f32.mxu0 0.0
    %1530 = vmatmul.mubr.f32.gmra.mrb[0].mxu0 %v928
    %v1531 = vpop.f32.mrb[0].mxu0
    %v1532 = vadd.f32 0.0, %v1531
    %v1533 = vpop.f32.mrb[0].mxu0
    %1534 = vdwg.mxu0
    %1535 = vst [vmem:[#allocation3 + $0x20] sm:$0xff] %v1527
    %1536 = vst [vmem:[#allocation3 + $0x28] sm:$0xff] %v1532
    %v1537 = vmul.f32 %v1369, %v140
    %v1538 = vmul.f32 %v1370, %v140
    %1539 = vadd.xlane.f32.xlu0 %v1537
    %v1540 = vpop.xlane.xlu0 %1539
    %1541 = vadd.xlane.f32.xlu0 %v1538
    %v1542 = vpop.xlane.xlu0 %1541
    %v1543 = vmul.f32 %v1540, 0.03125
    %v1544 = vmul.f32 %v1542, 0.03125
    %v1545 = vsub.f32 %v1369, %v1543
    %v1546 = vsub.f32 %v1370, %v1544
    %v1547 = vmul.f32 %v1545, %v140
    %v1548 = vmul.f32 %v1546, %v140
    %v1549 = vmul.f32 %v1547, %v1547
    %v1550 = vmul.f32 %v1548, %v1548
    %1551 = vadd.xlane.f32.xlu0 %v1549
    %v1552 = vpop.xlane.xlu0 %1551
    %1553 = vadd.xlane.f32.xlu0 %v1550
    %v1554 = vpop.xlane.xlu0 %1553
    %v1555 = vmul.f32 %v1552, 0.03125
    %v1556 = vmul.f32 %v1554, 0.03125
    %v1557 = vadd.f32 %v1555, 1e-05
    %v1558 = vadd.f32 %v1556, 1e-05
    %v1559 = vrsqrt.pop %v1557
    %v1560 = vrsqrt.pop %v1558
    %v1561 = vmul.f32 %v1547, %v1559
    %v1562 = vmul.f32 %v1548, %v1560
    %1563 = vst [vmem:[#allocation15] sm:$0xff] %v1561
    %1564 = vst [vmem:[#allocation15 + $0x8] sm:$0xff] %v1562
    // Predicated region
    $region82: #{gnn_based_protein_forward.1} parent=1 // pred_check
      _
    $region83: #{gnn_based_protein_forward.1} parent=1 // pred_check_branch
      %1566 = sbr.rel (0) target = $region85
    $region84: #{gnn_based_protein_forward.1} parent=1 // pred_region
      %s1568 = ssub.s32 256, 256
      %1569 = vsyncadd [#allocation6], %s1568
      %s1570 = sshll.u32 [#allocation15], 4
      %s1571 = int_to_ptr.vmem [resolvable:$true] %s1570
      %1576 = dma.vmem_to_hbm [thread:$0]  %s1571, 256, %s14, [#allocation6], 128, 128, 8
    $region85: #{gnn_based_protein_forward.1} parent=1 // pred_fallthru
      _
    // Predicated region
    $region86: #{gnn_based_protein_forward.1} parent=1 // pred_check
      _
    $region87: #{gnn_based_protein_forward.1} parent=1 // pred_check_branch
      %1578 = sbr.rel (0) target = $region89
    $region88: #{gnn_based_protein_forward.1} parent=1 // pred_region
      %1579 = dma.done [#allocation6], 256
    $region89: #{gnn_based_protein_forward.1} parent=1 // pred_fallthru
      _
    %1580 = vsyncpa [#allocation5], 1
    %1581 = vsyncpa [#allocation8], 1
    %1582 = vsyncpa [#allocation11], 1
    %1583 = vsyncpa [#allocation14], 1
    %1584 = vsyncpa [#allocation6], 1

</llo_original>
